<compile_context>
chip_gen: v5e
topology: v5e:2x2
jax: 0.10.0
libtpu: 0.0.40
codegen_flags: <defaults>
</compile_context>

<pallas_src>
import functools

import jax
import jax.numpy as jnp
from jax import lax
from jax.experimental import pallas as pl
from jax.experimental.pallas import tpu as pltpu


_LANE_CHUNK = 512          # inner batch-column chunk: h chunk = (40, 512) f32 = 20 vregs
_TB_CAP = 196608           # keep 128*TB (double-buffered x+out blocks) <= ~24 MiB
_VMEM_LIMIT = 32 * 1024 * 1024


def _mlp_kernel(x_ref, w1_ref, b1_ref, w2_ref, b2_ref, o_ref):
    # x_ref: (4, TB)   w1_ref: (40, 4)  b1_ref: (40, 1)
    # w2_ref: (3, 40)  b2_ref: (3, 1)   o_ref: (3, TB)
    w1 = w1_ref[...]
    b1 = b1_ref[...]
    w2 = w2_ref[...]
    b2 = b2_ref[...]
    n_chunks = x_ref.shape[1] // _LANE_CHUNK   # static; TB is a multiple of _LANE_CHUNK

    def body(c, carry):
        col = pl.multiple_of(c * _LANE_CHUNK, _LANE_CHUNK)
        xc = x_ref[:, pl.ds(col, _LANE_CHUNK)]                       # (4, C) lane-dense load
        h = jnp.dot(w1, xc, preferred_element_type=jnp.float32)      # (40, C) on the MXU
        h = jnp.maximum(h + b1, 0.0)                                 # bias + ReLU on the VPU
        y = jnp.dot(w2, h, preferred_element_type=jnp.float32)       # (3, C) on the MXU
        o_ref[:, pl.ds(col, _LANE_CHUNK)] = (y + b2).astype(o_ref.dtype)
        return carry

    lax.fori_loop(0, n_chunks, body, 0, unroll=False)


def _cdiv(a, b):
    return -(-a // b)


def _round_up(n, m):
    return ((n + m - 1) // m) * m


@functools.partial(jax.jit, static_argnames=("block_b",))
def net2_forward(x, w1, b1, w2, b2, *, block_b=131072):
    """x: (B, 4) f32; w1: (40, 4); b1: (40,); w2: (3, 40); b2: (3,)  ->  (B, 3).

    Weights are in PyTorch's (out_features, in_features) layout.
    """
    B = x.shape[0]
    in_dim, hidden = w1.shape[1], w1.shape[0]
    out_dim = w2.shape[0]

    # --- tile-size selection (review items 4, 10, 11, v5e/v7x VMEM, v7x megacore) ---
    granule = _LANE_CHUNK
    tb_max = max(granule, _round_up(min(block_b, _TB_CAP), granule))
    # >= 2 grid steps once the batch is big enough so both v7x TCs get work.
    n_steps = max(_cdiv(B, tb_max), 2 if B > granule else 1)
    # Shrink TB toward ceil(B / n_steps) so total padding stays < n_steps * granule.
    TB = _round_up(_cdiv(B, n_steps), granule)
    Bp = n_steps * TB

    # Single fused XLA pad+transpose pass -> (4, Bp).  Padded tail columns are
    # zeros; their (garbage-free but meaningless) outputs are sliced off below.
    xT = jnp.pad(x, ((0, Bp - B), (0, 0))).T

    flops = 2 * Bp * (in_dim * hidden + hidden * out_dim)
    bytes_accessed = (Bp * (in_dim + out_dim) * 4
                      + (w1.size + b1.size + w2.size + b2.size) * 4)

    out_T = pl.pallas_call(
        _mlp_kernel,
        out_shape=jax.ShapeDtypeStruct((out_dim, Bp), jnp.float32),
        grid=(Bp // TB,),
        in_specs=[
            pl.BlockSpec((in_dim, TB), lambda i: (0, i)),       # x tile, pipelined
            pl.BlockSpec((hidden, in_dim), lambda i: (0, 0)),   # w1: grid-invariant resident
            pl.BlockSpec((hidden, 1), lambda i: (0, 0)),        # b1 column vector
            pl.BlockSpec((out_dim, hidden), lambda i: (0, 0)),  # w2
            pl.BlockSpec((out_dim, 1), lambda i: (0, 0)),       # b2
        ],
        out_specs=pl.BlockSpec((out_dim, TB), lambda i: (0, i)),
        compiler_params=pltpu.CompilerParams(
            dimension_semantics=("parallel",),                  # shard batch over TCs
            vmem_limit_bytes=_VMEM_LIMIT),
        cost_estimate=pl.CostEstimate(
            flops=flops, transcendentals=0, bytes_accessed=bytes_accessed),
    )(xT, w1, b1.reshape(-1, 1), w2, b2.reshape(-1, 1))

    return out_T[:, :B].T                                       # (B, 3)


def init_params(key):
    """PyTorch-default-style Linear init, weights in (out_features, in_features) layout."""
    k1, k2, k3, k4 = jax.random.split(key, 4)
    bound1 = 1.0 / jnp.sqrt(4.0)
    bound2 = 1.0 / jnp.sqrt(40.0)
    w1 = jax.random.uniform(k1, (40, 4), jnp.float32, -bound1, bound1)
    b1 = jax.random.uniform(k2, (40,), jnp.float32, -bound1, bound1)
    w2 = jax.random.uniform(k3, (3, 40), jnp.float32, -bound2, bound2)
    b2 = jax.random.uniform(k4, (3,), jnp.float32, -bound2, bound2)
    return w1, b1, w2, b2


def reference_forward(x, w1, b1, w2, b2):
    hp = jax.lax.Precision.HIGHEST
    h = jnp.maximum(jnp.dot(x, w1.T, precision=hp) + b1, 0.0)
    return jnp.dot(h, w2.T, precision=hp) + b2


if __name__ == "__main__":
    # Use exact f32 matmuls everywhere so the Pallas kernel and the XLA
    # reference agree to 1e-5 (avoids the TPU default bf16-matmul trap).
    jax.config.update("jax_default_matmul_precision", "highest")

    key = jax.random.PRNGKey(0)
    kx, kp = jax.random.split(key)
    w1, b1, w2, b2 = init_params(kp)

    # batch=2: minimal single-block case; batch=1500: forced 2-step grid
    # (both TensorCores on v7x) plus remainder padding.
    for batch in (2, 1500):
        x = jax.random.normal(jax.random.fold_in(kx, batch), (batch, 4), jnp.float32)
        out = jax.block_until_ready(net2_forward(x, w1, b1, w2, b2))
        ref = reference_forward(x, w1, b1, w2, b2)
        assert out.shape == (batch, 3), out.shape
        assert jnp.allclose(out, ref, atol=1e-5, rtol=1e-5)

    print("KERNEL_OK")
</pallas_src>

<mosaic_0001>
module attributes {stable_mosaic.version = 11 : i64} {
  func.func @_mlp_kernel(%arg0: i32, %arg1: memref<4x512xf32, #tpu.memory_space<vmem>>, %arg2: memref<40x4xf32, #tpu.memory_space<vmem>>, %arg3: memref<40x1xf32, #tpu.memory_space<vmem>>, %arg4: memref<3x40xf32, #tpu.memory_space<vmem>>, %arg5: memref<3x1xf32, #tpu.memory_space<vmem>>, %arg6: memref<3x512xf32, #tpu.memory_space<vmem>>) attributes {dimension_semantics = [#tpu.dimension_semantics<parallel>], iteration_bounds = array<i64: 1>, scalar_prefetch = 0 : i64, scratch_operands = 0 : i64, tpu.core_type = #tpu.core_type<tc>, window_params = [{transform_indices = @transform_0, window_bounds = array<i64: 4, 512>}, {pipeline_mode = #tpu.pipeline_mode<synchronous>, transform_indices = @transform_1, window_bounds = array<i64: 40, 4>}, {pipeline_mode = #tpu.pipeline_mode<synchronous>, transform_indices = @transform_2, window_bounds = array<i64: 40, 1>}, {pipeline_mode = #tpu.pipeline_mode<synchronous>, transform_indices = @transform_3, window_bounds = array<i64: 3, 40>}, {pipeline_mode = #tpu.pipeline_mode<synchronous>, transform_indices = @transform_4, window_bounds = array<i64: 3, 1>}, {transform_indices = @transform_5, window_bounds = array<i64: 3, 512>}]} {
    %c0 = arith.constant 0 : index
    %c0_0 = arith.constant 0 : index
    %0 = vector.load %arg2[%c0, %c0_0] : memref<40x4xf32, #tpu.memory_space<vmem>>, vector<40x4xf32>
    %c0_1 = arith.constant 0 : index
    %c0_2 = arith.constant 0 : index
    %1 = vector.load %arg3[%c0_1, %c0_2] : memref<40x1xf32, #tpu.memory_space<vmem>>, vector<40x1xf32>
    %c0_3 = arith.constant 0 : index
    %c0_4 = arith.constant 0 : index
    %2 = vector.load %arg4[%c0_3, %c0_4] : memref<3x40xf32, #tpu.memory_space<vmem>>, vector<3x40xf32>
    %c0_5 = arith.constant 0 : index
    %c0_6 = arith.constant 0 : index
    %3 = vector.load %arg5[%c0_5, %c0_6] : memref<3x1xf32, #tpu.memory_space<vmem>>, vector<3x1xf32>
    %c0_i32 = arith.constant 0 : i32
    %c512_i32 = arith.constant 512 : i32
    %4 = arith.muli %c0_i32, %c512_i32 : i32
    %5 = tpu.assume_multiple %4, 512 : i32
    %c0_7 = arith.constant 0 : index
    %6 = arith.index_cast %5 : i32 to index
    %7 = vector.load %arg1[%c0_7, %6] : memref<4x512xf32, #tpu.memory_space<vmem>>, vector<4x512xf32>
    %cst = arith.constant dense<0.000000e+00> : vector<40x512xf32>
    %8 = tpu.matmul %0, %7, %cst {dimension_numbers = #tpu.dot_dimension_numbers<[1], [0], [0], [1], [0, 0, 1, 1], [], []>, precision = #tpu.contract_precision<fp32>} : vector<40x4xf32>, vector<4x512xf32>, vector<40x512xf32> -> vector<40x512xf32>
    %9 = vector.broadcast %1 : vector<40x1xf32> to vector<40x512xf32>
    %10 = arith.addf %8, %9 : vector<40x512xf32>
    %cst_8 = arith.constant 0.000000e+00 : f32
    %11 = vector.broadcast %cst_8 : f32 to vector<40x512xf32>
    %12 = arith.maximumf %10, %11 : vector<40x512xf32>
    %cst_9 = arith.constant dense<0.000000e+00> : vector<3x512xf32>
    %13 = tpu.matmul %2, %12, %cst_9 {dimension_numbers = #tpu.dot_dimension_numbers<[1], [0], [0], [1], [0, 0, 1, 1], [], []>, precision = #tpu.contract_precision<fp32>} : vector<3x40xf32>, vector<40x512xf32>, vector<3x512xf32> -> vector<3x512xf32>
    %14 = vector.broadcast %3 : vector<3x1xf32> to vector<3x512xf32>
    %15 = arith.addf %13, %14 : vector<3x512xf32>
    %c0_10 = arith.constant 0 : index
    %16 = arith.index_cast %5 : i32 to index
    %17 = vector.load %arg6[%c0_10, %16] : memref<3x512xf32, #tpu.memory_space<vmem>>, vector<3x512xf32>
    tpu.vector_store %arg6[%c0_10, %16], %15 {strides = array<i32>} : memref<3x512xf32, #tpu.memory_space<vmem>>, vector<3x512xf32>,
    %c1_i32 = arith.constant 1 : i32
    return
  }
  func.func @transform_0(%arg0: i32) -> (i32, i32) {
    %c0_i32 = arith.constant 0 : i32
    %c0_i32_0 = arith.constant 0 : i32
    return %c0_i32, %arg0 : i32, i32
  }
  func.func @transform_1(%arg0: i32) -> (i32, i32) {
    %c0_i32 = arith.constant 0 : i32
    %c0_i32_0 = arith.constant 0 : i32
    %c0_i32_1 = arith.constant 0 : i32
    return %c0_i32, %c0_i32_0 : i32, i32
  }
  func.func @transform_2(%arg0: i32) -> (i32, i32) {
    %c0_i32 = arith.constant 0 : i32
    %c0_i32_0 = arith.constant 0 : i32
    %c0_i32_1 = arith.constant 0 : i32
    return %c0_i32, %c0_i32_0 : i32, i32
  }
  func.func @transform_3(%arg0: i32) -> (i32, i32) {
    %c0_i32 = arith.constant 0 : i32
    %c0_i32_0 = arith.constant 0 : i32
    %c0_i32_1 = arith.constant 0 : i32
    return %c0_i32, %c0_i32_0 : i32, i32
  }
  func.func @transform_4(%arg0: i32) -> (i32, i32) {
    %c0_i32 = arith.constant 0 : i32
    %c0_i32_0 = arith.constant 0 : i32
    %c0_i32_1 = arith.constant 0 : i32
    return %c0_i32, %c0_i32_0 : i32, i32
  }
  func.func @transform_5(%arg0: i32) -> (i32, i32) {
    %c0_i32 = arith.constant 0 : i32
    %c0_i32_0 = arith.constant 0 : i32
    return %c0_i32, %arg0 : i32, i32
  }
}

</mosaic_0001>

<llo_original>
// kernel: net2_forward.1
$region0: #{net2_forward.1}
  #allocation0 [shape = 'u32[]', space=smem, size = 0x4, offset = 0x4, fixed_abs, tag = 'smem constant byte address 0x4 - core index']
  #allocation1 [shape = 'u32[72,128]{1,0:T(1,128)}', space=vmem, size = 0x9000, scoped, tag = 'internal scratch']
  %s0 = inlined_call_operand.vmem [shape: f32[4,512], index: 0, kind: input, shape index: {}]
  %s1 = inlined_call_operand.vmem [shape: f32[40,4], index: 1, kind: input, shape index: {}]
  %s2 = inlined_call_operand.vmem [shape: f32[40,1], index: 2, kind: input, shape index: {}]
  %s3 = inlined_call_operand.vmem [shape: f32[3,40], index: 3, kind: input, shape index: {}]
  %s4 = inlined_call_operand.vmem [shape: f32[3,1], index: 4, kind: input, shape index: {}]
  %s5 = inlined_call_operand.vmem [shape: f32[3,512], index: 5, kind: output, shape index: {}]
  %s6 = sld [smem:[#allocation0]]
  $region30: #{net2_forward.1} parent=0
    _
  %s8 = ssub.s32 1, %s6
  %s9 = scalar_select 0, %s8, %s6
  // Predicated region
  $region2: #{net2_forward.1} parent=0 // pred_check
    _
  $region3: #{net2_forward.1} parent=0 // pred_check_branch
    %11 = sbr.rel (0) target = $region5
  $region4: #{net2_forward.1} parent=0 // pred_region
    _
  $region5: #{net2_forward.1} parent=0 // pred_fallthru
    _
  // Predicated region
  $region6: #{net2_forward.1} parent=0 // pred_check
    _
  $region7: #{net2_forward.1} parent=0 // pred_check_branch
    %13 = sbr.rel (0) target = $region9
  $region8: #{net2_forward.1} parent=0 // pred_region
    _
  $region9: #{net2_forward.1} parent=0 // pred_fallthru
    _
  // Predicated region
  $region10: #{net2_forward.1} parent=0 // pred_check
    _
  $region11: #{net2_forward.1} parent=0 // pred_check_branch
    %15 = sbr.rel (0) target = $region13
  $region12: #{net2_forward.1} parent=0 // pred_region
    _
  $region13: #{net2_forward.1} parent=0 // pred_fallthru
    _
  // Predicated region
  $region14: #{net2_forward.1} parent=0 // pred_check
    _
  $region15: #{net2_forward.1} parent=0 // pred_check_branch
    %17 = sbr.rel (0) target = $region17
  $region16: #{net2_forward.1} parent=0 // pred_region
    _
  $region17: #{net2_forward.1} parent=0 // pred_fallthru
    _
  // Predicated region
  $region18: #{net2_forward.1} parent=0 // pred_check
    _
  $region19: #{net2_forward.1} parent=0 // pred_check_branch
    %19 = sbr.rel (0) target = $region21
  $region20: #{net2_forward.1} parent=0 // pred_region
    _
  $region21: #{net2_forward.1} parent=0 // pred_fallthru
    _
  %v20 = vld [vmem:[%s1] sm:$0xff]
  %v21 = vld [vmem:[%s1 + $0x8] sm:$0xff]
  %v22 = vld [vmem:[%s1 + $0x10] sm:$0xff]
  %v23 = vld [vmem:[%s1 + $0x18] sm:$0xff]
  %v24 = vld [vmem:[%s1 + $0x20] sm:$0xff]
  %v25 = vld [vmem:[%s2] sm:$0xff]
  %v26 = vld [vmem:[%s2 + $0x8] sm:$0xff]
  %v27 = vld [vmem:[%s2 + $0x10] sm:$0xff]
  %v28 = vld [vmem:[%s2 + $0x18] sm:$0xff]
  %v29 = vld [vmem:[%s2 + $0x20] sm:$0xff]
  %v30 = vld [vmem:[%s3] sm:$0x7]
  %v31 = vld [vmem:[%s4] sm:$0x7]
  %v32 = vld [vmem:[%s0] sm:$0xff]
  %v33 = vld [vmem:[%s0 + $0x8] sm:$0xff]
  %35 = vset.pattern.permute.xlu0 0
  %36 = vperm.xlu0 %35, %v25
  %v37 = vpop.permute.xlu0 %36
  %40 = vset.pattern.permute.xlu0 0
  %41 = vperm.xlu0 %40, %v26
  %v42 = vpop.permute.xlu0 %41
  %45 = vset.pattern.permute.xlu0 0
  %46 = vperm.xlu0 %45, %v27
  %v47 = vpop.permute.xlu0 %46
  %50 = vset.pattern.permute.xlu0 0
  %51 = vperm.xlu0 %50, %v28
  %v52 = vpop.permute.xlu0 %51
  %55 = vset.pattern.permute.xlu0 0
  %56 = vperm.xlu0 %55, %v29
  %v57 = vpop.permute.xlu0 %56
  %61 = vst [vmem:[#allocation1] ss:$2 sm:$0xff] %v32
  %s62 = scalar_lea.vmem [#allocation1], 16
  %63 = vst [vmem:[%s62] ss:$2 sm:$0xff] %v33
  %v64 = vld.sshfl [vmem:[#allocation1] sm:$0xff pattern:$0x75316420]
  %v65 = vld.sshfl [vmem:[#allocation1 + $0x8] sm:$0xff pattern:$0x75316420]
  %v66 = vld.sshfl [vmem:[#allocation1 + $0x10] sm:$0xff pattern:$0x75316420]
  %v67 = vld.sshfl [vmem:[#allocation1 + $0x18] sm:$0xff pattern:$0x75316420]
  %vm68 = vcmask 31744
  %v70 = vsel %vm68, %v20, 0
  %v73 = vsel %vm68, %v21, 0
  %v76 = vsel %vm68, %v22, 0
  %v79 = vsel %vm68, %v23, 0
  %v82 = vsel %vm68, %v24, 0
  %vm84 = vcmask 1043456
  %v85 = vsel %vm84, %v64, 0
  %v87 = vsel %vm84, %v65, 0
  %v89 = vsel %vm84, %v66, 0
  %v91 = vsel %vm84, %v67, 0
  %93 = vmatpush.msra.mxu0 0.0
  %94 = vmatpush.msra.mxu0 0.0
  %95 = vmatpush.msra.mxu0 0.0
  %96 = vmatpush.msra.mxu0 0.0
  %97 = vmatpush.msra.mxu0 0.0
  %98 = vmatpush.msra.mxu0 0.0
  %99 = vmatpush.msra.mxu0 0.0
  %100 = vmatpush.msra.mxu0 0.0
  %101 = vmatpush.msra.mxu0 0.0
  %102 = vmatpush.msra.mxu0 0.0
  %103 = vmatpush.msra.mxu0 0.0
  %104 = vmatpush.msra.mxu0 0.0
  %105 = vmatpush.msra.mxu0 0.0
  %106 = vmatpush.msra.mxu0 0.0
  %107 = vmatpush.msra.mxu0 0.0
  %v108 = vand.u32 %v85, 4294901760
  %109 = vmatpush.msra.mxu0 %v108
  %v110 = vand.u32 %v70, 4294901760
  %v111 = vsub.f32 %v70, %v110
  %v112 = vand.u32 %v111, 4294901760
  %v113 = vsub.f32 %v111, %v112
  %v114 = vand.u32 %v113, 4294901760
  %115 = vmatmul.f32.gmra.mxu0 %v114
  %v116 = vpop.f32.mrf.mxu0
  %v117 = vadd.f32 %v37, %v116
  %v118 = vand.u32 %v73, 4294901760
  %v119 = vsub.f32 %v73, %v118
  %v120 = vand.u32 %v119, 4294901760
  %v121 = vsub.f32 %v119, %v120
  %v122 = vand.u32 %v121, 4294901760
  %123 = vmatmul.f32.gmra.mxu0 %v122
  %v124 = vpop.f32.mrf.mxu0
  %v125 = vadd.f32 %v42, %v124
  %v126 = vand.u32 %v76, 4294901760
  %v127 = vsub.f32 %v76, %v126
  %v128 = vand.u32 %v127, 4294901760
  %v129 = vsub.f32 %v127, %v128
  %v130 = vand.u32 %v129, 4294901760
  %131 = vmatmul.f32.gmra.mxu0 %v130
  %v132 = vpop.f32.mrf.mxu0
  %v133 = vadd.f32 %v47, %v132
  %v134 = vand.u32 %v79, 4294901760
  %v135 = vsub.f32 %v79, %v134
  %v136 = vand.u32 %v135, 4294901760
  %v137 = vsub.f32 %v135, %v136
  %v138 = vand.u32 %v137, 4294901760
  %139 = vmatmul.f32.gmra.mxu0 %v138
  %v140 = vpop.f32.mrf.mxu0
  %v141 = vadd.f32 %v52, %v140
  %v142 = vand.u32 %v82, 4294901760
  %v143 = vsub.f32 %v82, %v142
  %v144 = vand.u32 %v143, 4294901760
  %v145 = vsub.f32 %v143, %v144
  %v146 = vand.u32 %v145, 4294901760
  %147 = vmatmul.f32.gmra.mxu0 %v146
  %v148 = vpop.f32.mrf.mxu0
  %v149 = vadd.f32 %v57, %v148
  %150 = vdwg.mxu0
  %151 = vmatpush.msra.mxu0 0.0
  %152 = vmatpush.msra.mxu0 0.0
  %153 = vmatpush.msra.mxu0 0.0
  %154 = vmatpush.msra.mxu0 0.0
  %155 = vmatpush.msra.mxu0 0.0
  %156 = vmatpush.msra.mxu0 0.0
  %157 = vmatpush.msra.mxu0 0.0
  %158 = vmatpush.msra.mxu0 0.0
  %159 = vmatpush.msra.mxu0 0.0
  %160 = vmatpush.msra.mxu0 0.0
  %161 = vmatpush.msra.mxu0 0.0
  %162 = vmatpush.msra.mxu0 0.0
  %163 = vmatpush.msra.mxu0 0.0
  %164 = vmatpush.msra.mxu0 0.0
  %165 = vmatpush.msra.mxu0 0.0
  %v166 = vand.u32 %v85, 4294901760
  %v167 = vsub.f32 %v85, %v166
  %v168 = vand.u32 %v167, 4294901760
  %v169 = vsub.f32 %v167, %v168
  %v170 = vand.u32 %v169, 4294901760
  %171 = vmatpush.msra.mxu0 %v170
  %v172 = vand.u32 %v70, 4294901760
  %173 = vmatmul.f32.gmra.mxu0 %v172
  %v174 = vpop.f32.mrf.mxu0
  %v175 = vadd.f32 %v117, %v174
  %v176 = vand.u32 %v73, 4294901760
  %177 = vmatmul.f32.gmra.mxu0 %v176
  %v178 = vpop.f32.mrf.mxu0
  %v179 = vadd.f32 %v125, %v178
  %v180 = vand.u32 %v76, 4294901760
  %181 = vmatmul.f32.gmra.mxu0 %v180
  %v182 = vpop.f32.mrf.mxu0
  %v183 = vadd.f32 %v133, %v182
  %v184 = vand.u32 %v79, 4294901760
  %185 = vmatmul.f32.gmra.mxu0 %v184
  %v186 = vpop.f32.mrf.mxu0
  %v187 = vadd.f32 %v141, %v186
  %v188 = vand.u32 %v82, 4294901760
  %189 = vmatmul.f32.gmra.mxu0 %v188
  %v190 = vpop.f32.mrf.mxu0
  %v191 = vadd.f32 %v149, %v190
  %192 = vdwg.mxu0
  %193 = vmatpush.msra.mxu0 0.0
  %194 = vmatpush.msra.mxu0 0.0
  %195 = vmatpush.msra.mxu0 0.0
  %196 = vmatpush.msra.mxu0 0.0
  %197 = vmatpush.msra.mxu0 0.0
  %198 = vmatpush.msra.mxu0 0.0
  %199 = vmatpush.msra.mxu0 0.0
  %200 = vmatpush.msra.mxu0 0.0
  %201 = vmatpush.msra.mxu0 0.0
  %202 = vmatpush.msra.mxu0 0.0
  %203 = vmatpush.msra.mxu0 0.0
  %204 = vmatpush.msra.mxu0 0.0
  %205 = vmatpush.msra.mxu0 0.0
  %206 = vmatpush.msra.mxu0 0.0
  %207 = vmatpush.msra.mxu0 0.0
  %v208 = vand.u32 %v85, 4294901760
  %v209 = vsub.f32 %v85, %v208
  %210 = vmatpush.msra.mxu0 %v209
  %v211 = vand.u32 %v70, 4294901760
  %v212 = vsub.f32 %v70, %v211
  %213 = vmatmul.f32.gmra.mxu0 %v212
  %v214 = vpop.f32.mrf.mxu0
  %v215 = vadd.f32 %v175, %v214
  %v216 = vand.u32 %v73, 4294901760
  %v217 = vsub.f32 %v73, %v216
  %218 = vmatmul.f32.gmra.mxu0 %v217
  %v219 = vpop.f32.mrf.mxu0
  %v220 = vadd.f32 %v179, %v219
  %v221 = vand.u32 %v76, 4294901760
  %v222 = vsub.f32 %v76, %v221
  %223 = vmatmul.f32.gmra.mxu0 %v222
  %v224 = vpop.f32.mrf.mxu0
  %v225 = vadd.f32 %v183, %v224
  %v226 = vand.u32 %v79, 4294901760
  %v227 = vsub.f32 %v79, %v226
  %228 = vmatmul.f32.gmra.mxu0 %v227
  %v229 = vpop.f32.mrf.mxu0
  %v230 = vadd.f32 %v187, %v229
  %v231 = vand.u32 %v82, 4294901760
  %v232 = vsub.f32 %v82, %v231
  %233 = vmatmul.f32.gmra.mxu0 %v232
  %v234 = vpop.f32.mrf.mxu0
  %v235 = vadd.f32 %v191, %v234
  %236 = vdwg.mxu0
  %237 = vmatpush.msra.mxu0 0.0
  %238 = vmatpush.msra.mxu0 0.0
  %239 = vmatpush.msra.mxu0 0.0
  %240 = vmatpush.msra.mxu0 0.0
  %241 = vmatpush.msra.mxu0 0.0
  %242 = vmatpush.msra.mxu0 0.0
  %243 = vmatpush.msra.mxu0 0.0
  %244 = vmatpush.msra.mxu0 0.0
  %245 = vmatpush.msra.mxu0 0.0
  %246 = vmatpush.msra.mxu0 0.0
  %247 = vmatpush.msra.mxu0 0.0
  %248 = vmatpush.msra.mxu0 0.0
  %249 = vmatpush.msra.mxu0 0.0
  %250 = vmatpush.msra.mxu0 0.0
  %251 = vmatpush.msra.mxu0 0.0
  %v252 = vand.u32 %v85, 4294901760
  %253 = vmatpush.msra.mxu0 %v252
  %v254 = vand.u32 %v70, 4294901760
  %v255 = vsub.f32 %v70, %v254
  %v256 = vand.u32 %v255, 4294901760
  %257 = vmatmul.f32.gmra.mxu0 %v256
  %v258 = vpop.f32.mrf.mxu0
  %v259 = vadd.f32 %v215, %v258
  %v260 = vand.u32 %v73, 4294901760
  %v261 = vsub.f32 %v73, %v260
  %v262 = vand.u32 %v261, 4294901760
  %263 = vmatmul.f32.gmra.mxu0 %v262
  %v264 = vpop.f32.mrf.mxu0
  %v265 = vadd.f32 %v220, %v264
  %v266 = vand.u32 %v76, 4294901760
  %v267 = vsub.f32 %v76, %v266
  %v268 = vand.u32 %v267, 4294901760
  %269 = vmatmul.f32.gmra.mxu0 %v268
  %v270 = vpop.f32.mrf.mxu0
  %v271 = vadd.f32 %v225, %v270
  %v272 = vand.u32 %v79, 4294901760
  %v273 = vsub.f32 %v79, %v272
  %v274 = vand.u32 %v273, 4294901760
  %275 = vmatmul.f32.gmra.mxu0 %v274
  %v276 = vpop.f32.mrf.mxu0
  %v277 = vadd.f32 %v230, %v276
  %v278 = vand.u32 %v82, 4294901760
  %v279 = vsub.f32 %v82, %v278
  %v280 = vand.u32 %v279, 4294901760
  %281 = vmatmul.f32.gmra.mxu0 %v280
  %v282 = vpop.f32.mrf.mxu0
  %v283 = vadd.f32 %v235, %v282
  %284 = vdwg.mxu0
  %285 = vmatpush.msra.mxu0 0.0
  %286 = vmatpush.msra.mxu0 0.0
  %287 = vmatpush.msra.mxu0 0.0
  %288 = vmatpush.msra.mxu0 0.0
  %289 = vmatpush.msra.mxu0 0.0
  %290 = vmatpush.msra.mxu0 0.0
  %291 = vmatpush.msra.mxu0 0.0
  %292 = vmatpush.msra.mxu0 0.0
  %293 = vmatpush.msra.mxu0 0.0
  %294 = vmatpush.msra.mxu0 0.0
  %295 = vmatpush.msra.mxu0 0.0
  %296 = vmatpush.msra.mxu0 0.0
  %297 = vmatpush.msra.mxu0 0.0
  %298 = vmatpush.msra.mxu0 0.0
  %299 = vmatpush.msra.mxu0 0.0
  %v300 = vand.u32 %v85, 4294901760
  %v301 = vsub.f32 %v85, %v300
  %v302 = vand.u32 %v301, 4294901760
  %303 = vmatpush.msra.mxu0 %v302
  %v304 = vand.u32 %v70, 4294901760
  %305 = vmatmul.f32.gmra.mxu0 %v304
  %v306 = vpop.f32.mrf.mxu0
  %v307 = vadd.f32 %v259, %v306
  %v308 = vand.u32 %v73, 4294901760
  %309 = vmatmul.f32.gmra.mxu0 %v308
  %v310 = vpop.f32.mrf.mxu0
  %v311 = vadd.f32 %v265, %v310
  %v312 = vand.u32 %v76, 4294901760
  %313 = vmatmul.f32.gmra.mxu0 %v312
  %v314 = vpop.f32.mrf.mxu0
  %v315 = vadd.f32 %v271, %v314
  %v316 = vand.u32 %v79, 4294901760
  %317 = vmatmul.f32.gmra.mxu0 %v316
  %v318 = vpop.f32.mrf.mxu0
  %v319 = vadd.f32 %v277, %v318
  %v320 = vand.u32 %v82, 4294901760
  %321 = vmatmul.f32.gmra.mxu0 %v320
  %v322 = vpop.f32.mrf.mxu0
  %v323 = vadd.f32 %v283, %v322
  %324 = vdwg.mxu0
  %325 = vmatpush.msra.mxu0 0.0
  %326 = vmatpush.msra.mxu0 0.0
  %327 = vmatpush.msra.mxu0 0.0
  %328 = vmatpush.msra.mxu0 0.0
  %329 = vmatpush.msra.mxu0 0.0
  %330 = vmatpush.msra.mxu0 0.0
  %331 = vmatpush.msra.mxu0 0.0
  %332 = vmatpush.msra.mxu0 0.0
  %333 = vmatpush.msra.mxu0 0.0
  %334 = vmatpush.msra.mxu0 0.0
  %335 = vmatpush.msra.mxu0 0.0
  %336 = vmatpush.msra.mxu0 0.0
  %337 = vmatpush.msra.mxu0 0.0
  %338 = vmatpush.msra.mxu0 0.0
  %339 = vmatpush.msra.mxu0 0.0
  %v340 = vand.u32 %v85, 4294901760
  %341 = vmatpush.msra.mxu0 %v340
  %v342 = vand.u32 %v70, 4294901760
  %343 = vmatmul.f32.gmra.mxu0 %v342
  %v344 = vpop.f32.mrf.mxu0
  %v345 = vadd.f32 %v307, %v344
  %v346 = vand.u32 %v73, 4294901760
  %347 = vmatmul.f32.gmra.mxu0 %v346
  %v348 = vpop.f32.mrf.mxu0
  %v349 = vadd.f32 %v311, %v348
  %v350 = vand.u32 %v76, 4294901760
  %351 = vmatmul.f32.gmra.mxu0 %v350
  %v352 = vpop.f32.mrf.mxu0
  %v353 = vadd.f32 %v315, %v352
  %v354 = vand.u32 %v79, 4294901760
  %355 = vmatmul.f32.gmra.mxu0 %v354
  %v356 = vpop.f32.mrf.mxu0
  %v357 = vadd.f32 %v319, %v356
  %v358 = vand.u32 %v82, 4294901760
  %359 = vmatmul.f32.gmra.mxu0 %v358
  %v360 = vpop.f32.mrf.mxu0
  %v361 = vadd.f32 %v323, %v360
  %362 = vdwg.mxu0
  %363 = vmatpush.msra.mxu0 0.0
  %364 = vmatpush.msra.mxu0 0.0
  %365 = vmatpush.msra.mxu0 0.0
  %366 = vmatpush.msra.mxu0 0.0
  %367 = vmatpush.msra.mxu0 0.0
  %368 = vmatpush.msra.mxu0 0.0
  %369 = vmatpush.msra.mxu0 0.0
  %370 = vmatpush.msra.mxu0 0.0
  %371 = vmatpush.msra.mxu0 0.0
  %372 = vmatpush.msra.mxu0 0.0
  %373 = vmatpush.msra.mxu0 0.0
  %374 = vmatpush.msra.mxu0 0.0
  %375 = vmatpush.msra.mxu0 0.0
  %376 = vmatpush.msra.mxu0 0.0
  %377 = vmatpush.msra.mxu0 0.0
  %v378 = vand.u32 %v87, 4294901760
  %379 = vmatpush.msra.mxu0 %v378
  %v380 = vand.u32 %v70, 4294901760
  %v381 = vsub.f32 %v70, %v380
  %v382 = vand.u32 %v381, 4294901760
  %v383 = vsub.f32 %v381, %v382
  %v384 = vand.u32 %v383, 4294901760
  %385 = vmatmul.f32.gmra.mxu0 %v384
  %v386 = vpop.f32.mrf.mxu0
  %v387 = vadd.f32 %v37, %v386
  %v388 = vand.u32 %v73, 4294901760
  %v389 = vsub.f32 %v73, %v388
  %v390 = vand.u32 %v389, 4294901760
  %v391 = vsub.f32 %v389, %v390
  %v392 = vand.u32 %v391, 4294901760
  %393 = vmatmul.f32.gmra.mxu0 %v392
  %v394 = vpop.f32.mrf.mxu0
  %v395 = vadd.f32 %v42, %v394
  %v396 = vand.u32 %v76, 4294901760
  %v397 = vsub.f32 %v76, %v396
  %v398 = vand.u32 %v397, 4294901760
  %v399 = vsub.f32 %v397, %v398
  %v400 = vand.u32 %v399, 4294901760
  %401 = vmatmul.f32.gmra.mxu0 %v400
  %v402 = vpop.f32.mrf.mxu0
  %v403 = vadd.f32 %v47, %v402
  %v404 = vand.u32 %v79, 4294901760
  %v405 = vsub.f32 %v79, %v404
  %v406 = vand.u32 %v405, 4294901760
  %v407 = vsub.f32 %v405, %v406
  %v408 = vand.u32 %v407, 4294901760
  %409 = vmatmul.f32.gmra.mxu0 %v408
  %v410 = vpop.f32.mrf.mxu0
  %v411 = vadd.f32 %v52, %v410
  %v412 = vand.u32 %v82, 4294901760
  %v413 = vsub.f32 %v82, %v412
  %v414 = vand.u32 %v413, 4294901760
  %v415 = vsub.f32 %v413, %v414
  %v416 = vand.u32 %v415, 4294901760
  %417 = vmatmul.f32.gmra.mxu0 %v416
  %v418 = vpop.f32.mrf.mxu0
  %v419 = vadd.f32 %v57, %v418
  %420 = vdwg.mxu0
  %421 = vmatpush.msra.mxu0 0.0
  %422 = vmatpush.msra.mxu0 0.0
  %423 = vmatpush.msra.mxu0 0.0
  %424 = vmatpush.msra.mxu0 0.0
  %425 = vmatpush.msra.mxu0 0.0
  %426 = vmatpush.msra.mxu0 0.0
  %427 = vmatpush.msra.mxu0 0.0
  %428 = vmatpush.msra.mxu0 0.0
  %429 = vmatpush.msra.mxu0 0.0
  %430 = vmatpush.msra.mxu0 0.0
  %431 = vmatpush.msra.mxu0 0.0
  %432 = vmatpush.msra.mxu0 0.0
  %433 = vmatpush.msra.mxu0 0.0
  %434 = vmatpush.msra.mxu0 0.0
  %435 = vmatpush.msra.mxu0 0.0
  %v436 = vand.u32 %v87, 4294901760
  %v437 = vsub.f32 %v87, %v436
  %v438 = vand.u32 %v437, 4294901760
  %v439 = vsub.f32 %v437, %v438
  %v440 = vand.u32 %v439, 4294901760
  %441 = vmatpush.msra.mxu0 %v440
  %v442 = vand.u32 %v70, 4294901760
  %443 = vmatmul.f32.gmra.mxu0 %v442
  %v444 = vpop.f32.mrf.mxu0
  %v445 = vadd.f32 %v387, %v444
  %v446 = vand.u32 %v73, 4294901760
  %447 = vmatmul.f32.gmra.mxu0 %v446
  %v448 = vpop.f32.mrf.mxu0
  %v449 = vadd.f32 %v395, %v448
  %v450 = vand.u32 %v76, 4294901760
  %451 = vmatmul.f32.gmra.mxu0 %v450
  %v452 = vpop.f32.mrf.mxu0
  %v453 = vadd.f32 %v403, %v452
  %v454 = vand.u32 %v79, 4294901760
  %455 = vmatmul.f32.gmra.mxu0 %v454
  %v456 = vpop.f32.mrf.mxu0
  %v457 = vadd.f32 %v411, %v456
  %v458 = vand.u32 %v82, 4294901760
  %459 = vmatmul.f32.gmra.mxu0 %v458
  %v460 = vpop.f32.mrf.mxu0
  %v461 = vadd.f32 %v419, %v460
  %462 = vdwg.mxu0
  %463 = vmatpush.msra.mxu0 0.0
  %464 = vmatpush.msra.mxu0 0.0
  %465 = vmatpush.msra.mxu0 0.0
  %466 = vmatpush.msra.mxu0 0.0
  %467 = vmatpush.msra.mxu0 0.0
  %468 = vmatpush.msra.mxu0 0.0
  %469 = vmatpush.msra.mxu0 0.0
  %470 = vmatpush.msra.mxu0 0.0
  %471 = vmatpush.msra.mxu0 0.0
  %472 = vmatpush.msra.mxu0 0.0
  %473 = vmatpush.msra.mxu0 0.0
  %474 = vmatpush.msra.mxu0 0.0
  %475 = vmatpush.msra.mxu0 0.0
  %476 = vmatpush.msra.mxu0 0.0
  %477 = vmatpush.msra.mxu0 0.0
  %v478 = vand.u32 %v87, 4294901760
  %v479 = vsub.f32 %v87, %v478
  %480 = vmatpush.msra.mxu0 %v479
  %v481 = vand.u32 %v70, 4294901760
  %v482 = vsub.f32 %v70, %v481
  %483 = vmatmul.f32.gmra.mxu0 %v482
  %v484 = vpop.f32.mrf.mxu0
  %v485 = vadd.f32 %v445, %v484
  %v486 = vand.u32 %v73, 4294901760
  %v487 = vsub.f32 %v73, %v486
  %488 = vmatmul.f32.gmra.mxu0 %v487
  %v489 = vpop.f32.mrf.mxu0
  %v490 = vadd.f32 %v449, %v489
  %v491 = vand.u32 %v76, 4294901760
  %v492 = vsub.f32 %v76, %v491
  %493 = vmatmul.f32.gmra.mxu0 %v492
  %v494 = vpop.f32.mrf.mxu0
  %v495 = vadd.f32 %v453, %v494
  %v496 = vand.u32 %v79, 4294901760
  %v497 = vsub.f32 %v79, %v496
  %498 = vmatmul.f32.gmra.mxu0 %v497
  %v499 = vpop.f32.mrf.mxu0
  %v500 = vadd.f32 %v457, %v499
  %v501 = vand.u32 %v82, 4294901760
  %v502 = vsub.f32 %v82, %v501
  %503 = vmatmul.f32.gmra.mxu0 %v502
  %v504 = vpop.f32.mrf.mxu0
  %v505 = vadd.f32 %v461, %v504
  %506 = vdwg.mxu0
  %507 = vmatpush.msra.mxu0 0.0
  %508 = vmatpush.msra.mxu0 0.0
  %509 = vmatpush.msra.mxu0 0.0
  %510 = vmatpush.msra.mxu0 0.0
  %511 = vmatpush.msra.mxu0 0.0
  %512 = vmatpush.msra.mxu0 0.0
  %513 = vmatpush.msra.mxu0 0.0
  %514 = vmatpush.msra.mxu0 0.0
  %515 = vmatpush.msra.mxu0 0.0
  %516 = vmatpush.msra.mxu0 0.0
  %517 = vmatpush.msra.mxu0 0.0
  %518 = vmatpush.msra.mxu0 0.0
  %519 = vmatpush.msra.mxu0 0.0
  %520 = vmatpush.msra.mxu0 0.0
  %521 = vmatpush.msra.mxu0 0.0
  %v522 = vand.u32 %v87, 4294901760
  %523 = vmatpush.msra.mxu0 %v522
  %v524 = vand.u32 %v70, 4294901760
  %v525 = vsub.f32 %v70, %v524
  %v526 = vand.u32 %v525, 4294901760
  %527 = vmatmul.f32.gmra.mxu0 %v526
  %v528 = vpop.f32.mrf.mxu0
  %v529 = vadd.f32 %v485, %v528
  %v530 = vand.u32 %v73, 4294901760
  %v531 = vsub.f32 %v73, %v530
  %v532 = vand.u32 %v531, 4294901760
  %533 = vmatmul.f32.gmra.mxu0 %v532
  %v534 = vpop.f32.mrf.mxu0
  %v535 = vadd.f32 %v490, %v534
  %v536 = vand.u32 %v76, 4294901760
  %v537 = vsub.f32 %v76, %v536
  %v538 = vand.u32 %v537, 4294901760
  %539 = vmatmul.f32.gmra.mxu0 %v538
  %v540 = vpop.f32.mrf.mxu0
  %v541 = vadd.f32 %v495, %v540
  %v542 = vand.u32 %v79, 4294901760
  %v543 = vsub.f32 %v79, %v542
  %v544 = vand.u32 %v543, 4294901760
  %545 = vmatmul.f32.gmra.mxu0 %v544
  %v546 = vpop.f32.mrf.mxu0
  %v547 = vadd.f32 %v500, %v546
  %v548 = vand.u32 %v82, 4294901760
  %v549 = vsub.f32 %v82, %v548
  %v550 = vand.u32 %v549, 4294901760
  %551 = vmatmul.f32.gmra.mxu0 %v550
  %v552 = vpop.f32.mrf.mxu0
  %v553 = vadd.f32 %v505, %v552
  %554 = vdwg.mxu0
  %555 = vmatpush.msra.mxu0 0.0
  %556 = vmatpush.msra.mxu0 0.0
  %557 = vmatpush.msra.mxu0 0.0
  %558 = vmatpush.msra.mxu0 0.0
  %559 = vmatpush.msra.mxu0 0.0
  %560 = vmatpush.msra.mxu0 0.0
  %561 = vmatpush.msra.mxu0 0.0
  %562 = vmatpush.msra.mxu0 0.0
  %563 = vmatpush.msra.mxu0 0.0
  %564 = vmatpush.msra.mxu0 0.0
  %565 = vmatpush.msra.mxu0 0.0
  %566 = vmatpush.msra.mxu0 0.0
  %567 = vmatpush.msra.mxu0 0.0
  %568 = vmatpush.msra.mxu0 0.0
  %569 = vmatpush.msra.mxu0 0.0
  %v570 = vand.u32 %v87, 4294901760
  %v571 = vsub.f32 %v87, %v570
  %v572 = vand.u32 %v571, 4294901760
  %573 = vmatpush.msra.mxu0 %v572
  %v574 = vand.u32 %v70, 4294901760
  %575 = vmatmul.f32.gmra.mxu0 %v574
  %v576 = vpop.f32.mrf.mxu0
  %v577 = vadd.f32 %v529, %v576
  %v578 = vand.u32 %v73, 4294901760
  %579 = vmatmul.f32.gmra.mxu0 %v578
  %v580 = vpop.f32.mrf.mxu0
  %v581 = vadd.f32 %v535, %v580
  %v582 = vand.u32 %v76, 4294901760
  %583 = vmatmul.f32.gmra.mxu0 %v582
  %v584 = vpop.f32.mrf.mxu0
  %v585 = vadd.f32 %v541, %v584
  %v586 = vand.u32 %v79, 4294901760
  %587 = vmatmul.f32.gmra.mxu0 %v586
  %v588 = vpop.f32.mrf.mxu0
  %v589 = vadd.f32 %v547, %v588
  %v590 = vand.u32 %v82, 4294901760
  %591 = vmatmul.f32.gmra.mxu0 %v590
  %v592 = vpop.f32.mrf.mxu0
  %v593 = vadd.f32 %v553, %v592
  %594 = vdwg.mxu0
  %595 = vmatpush.msra.mxu0 0.0
  %596 = vmatpush.msra.mxu0 0.0
  %597 = vmatpush.msra.mxu0 0.0
  %598 = vmatpush.msra.mxu0 0.0
  %599 = vmatpush.msra.mxu0 0.0
  %600 = vmatpush.msra.mxu0 0.0
  %601 = vmatpush.msra.mxu0 0.0
  %602 = vmatpush.msra.mxu0 0.0
  %603 = vmatpush.msra.mxu0 0.0
  %604 = vmatpush.msra.mxu0 0.0
  %605 = vmatpush.msra.mxu0 0.0
  %606 = vmatpush.msra.mxu0 0.0
  %607 = vmatpush.msra.mxu0 0.0
  %608 = vmatpush.msra.mxu0 0.0
  %609 = vmatpush.msra.mxu0 0.0
  %v610 = vand.u32 %v87, 4294901760
  %611 = vmatpush.msra.mxu0 %v610
  %v612 = vand.u32 %v70, 4294901760
  %613 = vmatmul.f32.gmra.mxu0 %v612
  %v614 = vpop.f32.mrf.mxu0
  %v615 = vadd.f32 %v577, %v614
  %v616 = vand.u32 %v73, 4294901760
  %617 = vmatmul.f32.gmra.mxu0 %v616
  %v618 = vpop.f32.mrf.mxu0
  %v619 = vadd.f32 %v581, %v618
  %v620 = vand.u32 %v76, 4294901760
  %621 = vmatmul.f32.gmra.mxu0 %v620
  %v622 = vpop.f32.mrf.mxu0
  %v623 = vadd.f32 %v585, %v622
  %v624 = vand.u32 %v79, 4294901760
  %625 = vmatmul.f32.gmra.mxu0 %v624
  %v626 = vpop.f32.mrf.mxu0
  %v627 = vadd.f32 %v589, %v626
  %v628 = vand.u32 %v82, 4294901760
  %629 = vmatmul.f32.gmra.mxu0 %v628
  %v630 = vpop.f32.mrf.mxu0
  %v631 = vadd.f32 %v593, %v630
  %632 = vdwg.mxu0
  %633 = vmatpush.msra.mxu0 0.0
  %634 = vmatpush.msra.mxu0 0.0
  %635 = vmatpush.msra.mxu0 0.0
  %636 = vmatpush.msra.mxu0 0.0
  %637 = vmatpush.msra.mxu0 0.0
  %638 = vmatpush.msra.mxu0 0.0
  %639 = vmatpush.msra.mxu0 0.0
  %640 = vmatpush.msra.mxu0 0.0
  %641 = vmatpush.msra.mxu0 0.0
  %642 = vmatpush.msra.mxu0 0.0
  %643 = vmatpush.msra.mxu0 0.0
  %644 = vmatpush.msra.mxu0 0.0
  %645 = vmatpush.msra.mxu0 0.0
  %646 = vmatpush.msra.mxu0 0.0
  %647 = vmatpush.msra.mxu0 0.0
  %v648 = vand.u32 %v89, 4294901760
  %649 = vmatpush.msra.mxu0 %v648
  %v650 = vand.u32 %v70, 4294901760
  %v651 = vsub.f32 %v70, %v650
  %v652 = vand.u32 %v651, 4294901760
  %v653 = vsub.f32 %v651, %v652
  %v654 = vand.u32 %v653, 4294901760
  %655 = vmatmul.f32.gmra.mxu0 %v654
  %v656 = vpop.f32.mrf.mxu0
  %v657 = vadd.f32 %v37, %v656
  %v658 = vand.u32 %v73, 4294901760
  %v659 = vsub.f32 %v73, %v658
  %v660 = vand.u32 %v659, 4294901760
  %v661 = vsub.f32 %v659, %v660
  %v662 = vand.u32 %v661, 4294901760
  %663 = vmatmul.f32.gmra.mxu0 %v662
  %v664 = vpop.f32.mrf.mxu0
  %v665 = vadd.f32 %v42, %v664
  %v666 = vand.u32 %v76, 4294901760
  %v667 = vsub.f32 %v76, %v666
  %v668 = vand.u32 %v667, 4294901760
  %v669 = vsub.f32 %v667, %v668
  %v670 = vand.u32 %v669, 4294901760
  %671 = vmatmul.f32.gmra.mxu0 %v670
  %v672 = vpop.f32.mrf.mxu0
  %v673 = vadd.f32 %v47, %v672
  %v674 = vand.u32 %v79, 4294901760
  %v675 = vsub.f32 %v79, %v674
  %v676 = vand.u32 %v675, 4294901760
  %v677 = vsub.f32 %v675, %v676
  %v678 = vand.u32 %v677, 4294901760
  %679 = vmatmul.f32.gmra.mxu0 %v678
  %v680 = vpop.f32.mrf.mxu0
  %v681 = vadd.f32 %v52, %v680
  %v682 = vand.u32 %v82, 4294901760
  %v683 = vsub.f32 %v82, %v682
  %v684 = vand.u32 %v683, 4294901760
  %v685 = vsub.f32 %v683, %v684
  %v686 = vand.u32 %v685, 4294901760
  %687 = vmatmul.f32.gmra.mxu0 %v686
  %v688 = vpop.f32.mrf.mxu0
  %v689 = vadd.f32 %v57, %v688
  %690 = vdwg.mxu0
  %691 = vmatpush.msra.mxu0 0.0
  %692 = vmatpush.msra.mxu0 0.0
  %693 = vmatpush.msra.mxu0 0.0
  %694 = vmatpush.msra.mxu0 0.0
  %695 = vmatpush.msra.mxu0 0.0
  %696 = vmatpush.msra.mxu0 0.0
  %697 = vmatpush.msra.mxu0 0.0
  %698 = vmatpush.msra.mxu0 0.0
  %699 = vmatpush.msra.mxu0 0.0
  %700 = vmatpush.msra.mxu0 0.0
  %701 = vmatpush.msra.mxu0 0.0
  %702 = vmatpush.msra.mxu0 0.0
  %703 = vmatpush.msra.mxu0 0.0
  %704 = vmatpush.msra.mxu0 0.0
  %705 = vmatpush.msra.mxu0 0.0
  %v706 = vand.u32 %v89, 4294901760
  %v707 = vsub.f32 %v89, %v706
  %v708 = vand.u32 %v707, 4294901760
  %v709 = vsub.f32 %v707, %v708
  %v710 = vand.u32 %v709, 4294901760
  %711 = vmatpush.msra.mxu0 %v710
  %v712 = vand.u32 %v70, 4294901760
  %713 = vmatmul.f32.gmra.mxu0 %v712
  %v714 = vpop.f32.mrf.mxu0
  %v715 = vadd.f32 %v657, %v714
  %v716 = vand.u32 %v73, 4294901760
  %717 = vmatmul.f32.gmra.mxu0 %v716
  %v718 = vpop.f32.mrf.mxu0
  %v719 = vadd.f32 %v665, %v718
  %v720 = vand.u32 %v76, 4294901760
  %721 = vmatmul.f32.gmra.mxu0 %v720
  %v722 = vpop.f32.mrf.mxu0
  %v723 = vadd.f32 %v673, %v722
  %v724 = vand.u32 %v79, 4294901760
  %725 = vmatmul.f32.gmra.mxu0 %v724
  %v726 = vpop.f32.mrf.mxu0
  %v727 = vadd.f32 %v681, %v726
  %v728 = vand.u32 %v82, 4294901760
  %729 = vmatmul.f32.gmra.mxu0 %v728
  %v730 = vpop.f32.mrf.mxu0
  %v731 = vadd.f32 %v689, %v730
  %732 = vdwg.mxu0
  %733 = vmatpush.msra.mxu0 0.0
  %734 = vmatpush.msra.mxu0 0.0
  %735 = vmatpush.msra.mxu0 0.0
  %736 = vmatpush.msra.mxu0 0.0
  %737 = vmatpush.msra.mxu0 0.0
  %738 = vmatpush.msra.mxu0 0.0
  %739 = vmatpush.msra.mxu0 0.0
  %740 = vmatpush.msra.mxu0 0.0
  %741 = vmatpush.msra.mxu0 0.0
  %742 = vmatpush.msra.mxu0 0.0
  %743 = vmatpush.msra.mxu0 0.0
  %744 = vmatpush.msra.mxu0 0.0
  %745 = vmatpush.msra.mxu0 0.0
  %746 = vmatpush.msra.mxu0 0.0
  %747 = vmatpush.msra.mxu0 0.0
  %v748 = vand.u32 %v89, 4294901760
  %v749 = vsub.f32 %v89, %v748
  %750 = vmatpush.msra.mxu0 %v749
  %v751 = vand.u32 %v70, 4294901760
  %v752 = vsub.f32 %v70, %v751
  %753 = vmatmul.f32.gmra.mxu0 %v752
  %v754 = vpop.f32.mrf.mxu0
  %v755 = vadd.f32 %v715, %v754
  %v756 = vand.u32 %v73, 4294901760
  %v757 = vsub.f32 %v73, %v756
  %758 = vmatmul.f32.gmra.mxu0 %v757
  %v759 = vpop.f32.mrf.mxu0
  %v760 = vadd.f32 %v719, %v759
  %v761 = vand.u32 %v76, 4294901760
  %v762 = vsub.f32 %v76, %v761
  %763 = vmatmul.f32.gmra.mxu0 %v762
  %v764 = vpop.f32.mrf.mxu0
  %v765 = vadd.f32 %v723, %v764
  %v766 = vand.u32 %v79, 4294901760
  %v767 = vsub.f32 %v79, %v766
  %768 = vmatmul.f32.gmra.mxu0 %v767
  %v769 = vpop.f32.mrf.mxu0
  %v770 = vadd.f32 %v727, %v769
  %v771 = vand.u32 %v82, 4294901760
  %v772 = vsub.f32 %v82, %v771
  %773 = vmatmul.f32.gmra.mxu0 %v772
  %v774 = vpop.f32.mrf.mxu0
  %v775 = vadd.f32 %v731, %v774
  %776 = vdwg.mxu0
  %777 = vmatpush.msra.mxu0 0.0
  %778 = vmatpush.msra.mxu0 0.0
  %779 = vmatpush.msra.mxu0 0.0
  %780 = vmatpush.msra.mxu0 0.0
  %781 = vmatpush.msra.mxu0 0.0
  %782 = vmatpush.msra.mxu0 0.0
  %783 = vmatpush.msra.mxu0 0.0
  %784 = vmatpush.msra.mxu0 0.0
  %785 = vmatpush.msra.mxu0 0.0
  %786 = vmatpush.msra.mxu0 0.0
  %787 = vmatpush.msra.mxu0 0.0
  %788 = vmatpush.msra.mxu0 0.0
  %789 = vmatpush.msra.mxu0 0.0
  %790 = vmatpush.msra.mxu0 0.0
  %791 = vmatpush.msra.mxu0 0.0
  %v792 = vand.u32 %v89, 4294901760
  %793 = vmatpush.msra.mxu0 %v792
  %v794 = vand.u32 %v70, 4294901760
  %v795 = vsub.f32 %v70, %v794
  %v796 = vand.u32 %v795, 4294901760
  %797 = vmatmul.f32.gmra.mxu0 %v796
  %v798 = vpop.f32.mrf.mxu0
  %v799 = vadd.f32 %v755, %v798
  %v800 = vand.u32 %v73, 4294901760
  %v801 = vsub.f32 %v73, %v800
  %v802 = vand.u32 %v801, 4294901760
  %803 = vmatmul.f32.gmra.mxu0 %v802
  %v804 = vpop.f32.mrf.mxu0
  %v805 = vadd.f32 %v760, %v804
  %v806 = vand.u32 %v76, 4294901760
  %v807 = vsub.f32 %v76, %v806
  %v808 = vand.u32 %v807, 4294901760
  %809 = vmatmul.f32.gmra.mxu0 %v808
  %v810 = vpop.f32.mrf.mxu0
  %v811 = vadd.f32 %v765, %v810
  %v812 = vand.u32 %v79, 4294901760
  %v813 = vsub.f32 %v79, %v812
  %v814 = vand.u32 %v813, 4294901760
  %815 = vmatmul.f32.gmra.mxu0 %v814
  %v816 = vpop.f32.mrf.mxu0
  %v817 = vadd.f32 %v770, %v816
  %v818 = vand.u32 %v82, 4294901760
  %v819 = vsub.f32 %v82, %v818
  %v820 = vand.u32 %v819, 4294901760
  %821 = vmatmul.f32.gmra.mxu0 %v820
  %v822 = vpop.f32.mrf.mxu0
  %v823 = vadd.f32 %v775, %v822
  %824 = vdwg.mxu0
  %825 = vmatpush.msra.mxu0 0.0
  %826 = vmatpush.msra.mxu0 0.0
  %827 = vmatpush.msra.mxu0 0.0
  %828 = vmatpush.msra.mxu0 0.0
  %829 = vmatpush.msra.mxu0 0.0
  %830 = vmatpush.msra.mxu0 0.0
  %831 = vmatpush.msra.mxu0 0.0
  %832 = vmatpush.msra.mxu0 0.0
  %833 = vmatpush.msra.mxu0 0.0
  %834 = vmatpush.msra.mxu0 0.0
  %835 = vmatpush.msra.mxu0 0.0
  %836 = vmatpush.msra.mxu0 0.0
  %837 = vmatpush.msra.mxu0 0.0
  %838 = vmatpush.msra.mxu0 0.0
  %839 = vmatpush.msra.mxu0 0.0
  %v840 = vand.u32 %v89, 4294901760
  %v841 = vsub.f32 %v89, %v840
  %v842 = vand.u32 %v841, 4294901760
  %843 = vmatpush.msra.mxu0 %v842
  %v844 = vand.u32 %v70, 4294901760
  %845 = vmatmul.f32.gmra.mxu0 %v844
  %v846 = vpop.f32.mrf.mxu0
  %v847 = vadd.f32 %v799, %v846
  %v848 = vand.u32 %v73, 4294901760
  %849 = vmatmul.f32.gmra.mxu0 %v848
  %v850 = vpop.f32.mrf.mxu0
  %v851 = vadd.f32 %v805, %v850
  %v852 = vand.u32 %v76, 4294901760
  %853 = vmatmul.f32.gmra.mxu0 %v852
  %v854 = vpop.f32.mrf.mxu0
  %v855 = vadd.f32 %v811, %v854
  %v856 = vand.u32 %v79, 4294901760
  %857 = vmatmul.f32.gmra.mxu0 %v856
  %v858 = vpop.f32.mrf.mxu0
  %v859 = vadd.f32 %v817, %v858
  %v860 = vand.u32 %v82, 4294901760
  %861 = vmatmul.f32.gmra.mxu0 %v860
  %v862 = vpop.f32.mrf.mxu0
  %v863 = vadd.f32 %v823, %v862
  %864 = vdwg.mxu0
  %865 = vmatpush.msra.mxu0 0.0
  %866 = vmatpush.msra.mxu0 0.0
  %867 = vmatpush.msra.mxu0 0.0
  %868 = vmatpush.msra.mxu0 0.0
  %869 = vmatpush.msra.mxu0 0.0
  %870 = vmatpush.msra.mxu0 0.0
  %871 = vmatpush.msra.mxu0 0.0
  %872 = vmatpush.msra.mxu0 0.0
  %873 = vmatpush.msra.mxu0 0.0
  %874 = vmatpush.msra.mxu0 0.0
  %875 = vmatpush.msra.mxu0 0.0
  %876 = vmatpush.msra.mxu0 0.0
  %877 = vmatpush.msra.mxu0 0.0
  %878 = vmatpush.msra.mxu0 0.0
  %879 = vmatpush.msra.mxu0 0.0
  %v880 = vand.u32 %v89, 4294901760
  %881 = vmatpush.msra.mxu0 %v880
  %v882 = vand.u32 %v70, 4294901760
  %883 = vmatmul.f32.gmra.mxu0 %v882
  %v884 = vpop.f32.mrf.mxu0
  %v885 = vadd.f32 %v847, %v884
  %v886 = vand.u32 %v73, 4294901760
  %887 = vmatmul.f32.gmra.mxu0 %v886
  %v888 = vpop.f32.mrf.mxu0
  %v889 = vadd.f32 %v851, %v888
  %v890 = vand.u32 %v76, 4294901760
  %891 = vmatmul.f32.gmra.mxu0 %v890
  %v892 = vpop.f32.mrf.mxu0
  %v893 = vadd.f32 %v855, %v892
  %v894 = vand.u32 %v79, 4294901760
  %895 = vmatmul.f32.gmra.mxu0 %v894
  %v896 = vpop.f32.mrf.mxu0
  %v897 = vadd.f32 %v859, %v896
  %v898 = vand.u32 %v82, 4294901760
  %899 = vmatmul.f32.gmra.mxu0 %v898
  %v900 = vpop.f32.mrf.mxu0
  %v901 = vadd.f32 %v863, %v900
  %902 = vdwg.mxu0
  %903 = vmatpush.msra.mxu0 0.0
  %904 = vmatpush.msra.mxu0 0.0
  %905 = vmatpush.msra.mxu0 0.0
  %906 = vmatpush.msra.mxu0 0.0
  %907 = vmatpush.msra.mxu0 0.0
  %908 = vmatpush.msra.mxu0 0.0
  %909 = vmatpush.msra.mxu0 0.0
  %910 = vmatpush.msra.mxu0 0.0
  %911 = vmatpush.msra.mxu0 0.0
  %912 = vmatpush.msra.mxu0 0.0
  %913 = vmatpush.msra.mxu0 0.0
  %914 = vmatpush.msra.mxu0 0.0
  %915 = vmatpush.msra.mxu0 0.0
  %916 = vmatpush.msra.mxu0 0.0
  %917 = vmatpush.msra.mxu0 0.0
  %v918 = vand.u32 %v91, 4294901760
  %919 = vmatpush.msra.mxu0 %v918
  %v920 = vand.u32 %v70, 4294901760
  %v921 = vsub.f32 %v70, %v920
  %v922 = vand.u32 %v921, 4294901760
  %v923 = vsub.f32 %v921, %v922
  %v924 = vand.u32 %v923, 4294901760
  %925 = vmatmul.f32.gmra.mxu0 %v924
  %v926 = vpop.f32.mrf.mxu0
  %v927 = vadd.f32 %v37, %v926
  %v928 = vand.u32 %v73, 4294901760
  %v929 = vsub.f32 %v73, %v928
  %v930 = vand.u32 %v929, 4294901760
  %v931 = vsub.f32 %v929, %v930
  %v932 = vand.u32 %v931, 4294901760
  %933 = vmatmul.f32.gmra.mxu0 %v932
  %v934 = vpop.f32.mrf.mxu0
  %v935 = vadd.f32 %v42, %v934
  %v936 = vand.u32 %v76, 4294901760
  %v937 = vsub.f32 %v76, %v936
  %v938 = vand.u32 %v937, 4294901760
  %v939 = vsub.f32 %v937, %v938
  %v940 = vand.u32 %v939, 4294901760
  %941 = vmatmul.f32.gmra.mxu0 %v940
  %v942 = vpop.f32.mrf.mxu0
  %v943 = vadd.f32 %v47, %v942
  %v944 = vand.u32 %v79, 4294901760
  %v945 = vsub.f32 %v79, %v944
  %v946 = vand.u32 %v945, 4294901760
  %v947 = vsub.f32 %v945, %v946
  %v948 = vand.u32 %v947, 4294901760
  %949 = vmatmul.f32.gmra.mxu0 %v948
  %v950 = vpop.f32.mrf.mxu0
  %v951 = vadd.f32 %v52, %v950
  %v952 = vand.u32 %v82, 4294901760
  %v953 = vsub.f32 %v82, %v952
  %v954 = vand.u32 %v953, 4294901760
  %v955 = vsub.f32 %v953, %v954
  %v956 = vand.u32 %v955, 4294901760
  %957 = vmatmul.f32.gmra.mxu0 %v956
  %v958 = vpop.f32.mrf.mxu0
  %v959 = vadd.f32 %v57, %v958
  %960 = vdwg.mxu0
  %961 = vmatpush.msra.mxu0 0.0
  %962 = vmatpush.msra.mxu0 0.0
  %963 = vmatpush.msra.mxu0 0.0
  %964 = vmatpush.msra.mxu0 0.0
  %965 = vmatpush.msra.mxu0 0.0
  %966 = vmatpush.msra.mxu0 0.0
  %967 = vmatpush.msra.mxu0 0.0
  %968 = vmatpush.msra.mxu0 0.0
  %969 = vmatpush.msra.mxu0 0.0
  %970 = vmatpush.msra.mxu0 0.0
  %971 = vmatpush.msra.mxu0 0.0
  %972 = vmatpush.msra.mxu0 0.0
  %973 = vmatpush.msra.mxu0 0.0
  %974 = vmatpush.msra.mxu0 0.0
  %975 = vmatpush.msra.mxu0 0.0
  %v976 = vand.u32 %v91, 4294901760
  %v977 = vsub.f32 %v91, %v976
  %v978 = vand.u32 %v977, 4294901760
  %v979 = vsub.f32 %v977, %v978
  %v980 = vand.u32 %v979, 4294901760
  %981 = vmatpush.msra.mxu0 %v980
  %v982 = vand.u32 %v70, 4294901760
  %983 = vmatmul.f32.gmra.mxu0 %v982
  %v984 = vpop.f32.mrf.mxu0
  %v985 = vadd.f32 %v927, %v984
  %v986 = vand.u32 %v73, 4294901760
  %987 = vmatmul.f32.gmra.mxu0 %v986
  %v988 = vpop.f32.mrf.mxu0
  %v989 = vadd.f32 %v935, %v988
  %v990 = vand.u32 %v76, 4294901760
  %991 = vmatmul.f32.gmra.mxu0 %v990
  %v992 = vpop.f32.mrf.mxu0
  %v993 = vadd.f32 %v943, %v992
  %v994 = vand.u32 %v79, 4294901760
  %995 = vmatmul.f32.gmra.mxu0 %v994
  %v996 = vpop.f32.mrf.mxu0
  %v997 = vadd.f32 %v951, %v996
  %v998 = vand.u32 %v82, 4294901760
  %999 = vmatmul.f32.gmra.mxu0 %v998
  %v1000 = vpop.f32.mrf.mxu0
  %v1001 = vadd.f32 %v959, %v1000
  %1002 = vdwg.mxu0
  %1003 = vmatpush.msra.mxu0 0.0
  %1004 = vmatpush.msra.mxu0 0.0
  %1005 = vmatpush.msra.mxu0 0.0
  %1006 = vmatpush.msra.mxu0 0.0
  %1007 = vmatpush.msra.mxu0 0.0
  %1008 = vmatpush.msra.mxu0 0.0
  %1009 = vmatpush.msra.mxu0 0.0
  %1010 = vmatpush.msra.mxu0 0.0
  %1011 = vmatpush.msra.mxu0 0.0
  %1012 = vmatpush.msra.mxu0 0.0
  %1013 = vmatpush.msra.mxu0 0.0
  %1014 = vmatpush.msra.mxu0 0.0
  %1015 = vmatpush.msra.mxu0 0.0
  %1016 = vmatpush.msra.mxu0 0.0
  %1017 = vmatpush.msra.mxu0 0.0
  %v1018 = vand.u32 %v91, 4294901760
  %v1019 = vsub.f32 %v91, %v1018
  %1020 = vmatpush.msra.mxu0 %v1019
  %v1021 = vand.u32 %v70, 4294901760
  %v1022 = vsub.f32 %v70, %v1021
  %1023 = vmatmul.f32.gmra.mxu0 %v1022
  %v1024 = vpop.f32.mrf.mxu0
  %v1025 = vadd.f32 %v985, %v1024
  %v1026 = vand.u32 %v73, 4294901760
  %v1027 = vsub.f32 %v73, %v1026
  %1028 = vmatmul.f32.gmra.mxu0 %v1027
  %v1029 = vpop.f32.mrf.mxu0
  %v1030 = vadd.f32 %v989, %v1029
  %v1031 = vand.u32 %v76, 4294901760
  %v1032 = vsub.f32 %v76, %v1031
  %1033 = vmatmul.f32.gmra.mxu0 %v1032
  %v1034 = vpop.f32.mrf.mxu0
  %v1035 = vadd.f32 %v993, %v1034
  %v1036 = vand.u32 %v79, 4294901760
  %v1037 = vsub.f32 %v79, %v1036
  %1038 = vmatmul.f32.gmra.mxu0 %v1037
  %v1039 = vpop.f32.mrf.mxu0
  %v1040 = vadd.f32 %v997, %v1039
  %v1041 = vand.u32 %v82, 4294901760
  %v1042 = vsub.f32 %v82, %v1041
  %1043 = vmatmul.f32.gmra.mxu0 %v1042
  %v1044 = vpop.f32.mrf.mxu0
  %v1045 = vadd.f32 %v1001, %v1044
  %1046 = vdwg.mxu0
  %1047 = vmatpush.msra.mxu0 0.0
  %1048 = vmatpush.msra.mxu0 0.0
  %1049 = vmatpush.msra.mxu0 0.0
  %1050 = vmatpush.msra.mxu0 0.0
  %1051 = vmatpush.msra.mxu0 0.0
  %1052 = vmatpush.msra.mxu0 0.0
  %1053 = vmatpush.msra.mxu0 0.0
  %1054 = vmatpush.msra.mxu0 0.0
  %1055 = vmatpush.msra.mxu0 0.0
  %1056 = vmatpush.msra.mxu0 0.0
  %1057 = vmatpush.msra.mxu0 0.0
  %1058 = vmatpush.msra.mxu0 0.0
  %1059 = vmatpush.msra.mxu0 0.0
  %1060 = vmatpush.msra.mxu0 0.0
  %1061 = vmatpush.msra.mxu0 0.0
  %v1062 = vand.u32 %v91, 4294901760
  %1063 = vmatpush.msra.mxu0 %v1062
  %v1064 = vand.u32 %v70, 4294901760
  %v1065 = vsub.f32 %v70, %v1064
  %v1066 = vand.u32 %v1065, 4294901760
  %1067 = vmatmul.f32.gmra.mxu0 %v1066
  %v1068 = vpop.f32.mrf.mxu0
  %v1069 = vadd.f32 %v1025, %v1068
  %v1070 = vand.u32 %v73, 4294901760
  %v1071 = vsub.f32 %v73, %v1070
  %v1072 = vand.u32 %v1071, 4294901760
  %1073 = vmatmul.f32.gmra.mxu0 %v1072
  %v1074 = vpop.f32.mrf.mxu0
  %v1075 = vadd.f32 %v1030, %v1074
  %v1076 = vand.u32 %v76, 4294901760
  %v1077 = vsub.f32 %v76, %v1076
  %v1078 = vand.u32 %v1077, 4294901760
  %1079 = vmatmul.f32.gmra.mxu0 %v1078
  %v1080 = vpop.f32.mrf.mxu0
  %v1081 = vadd.f32 %v1035, %v1080
  %v1082 = vand.u32 %v79, 4294901760
  %v1083 = vsub.f32 %v79, %v1082
  %v1084 = vand.u32 %v1083, 4294901760
  %1085 = vmatmul.f32.gmra.mxu0 %v1084
  %v1086 = vpop.f32.mrf.mxu0
  %v1087 = vadd.f32 %v1040, %v1086
  %v1088 = vand.u32 %v82, 4294901760
  %v1089 = vsub.f32 %v82, %v1088
  %v1090 = vand.u32 %v1089, 4294901760
  %1091 = vmatmul.f32.gmra.mxu0 %v1090
  %v1092 = vpop.f32.mrf.mxu0
  %v1093 = vadd.f32 %v1045, %v1092
  %1094 = vdwg.mxu0
  %1095 = vmatpush.msra.mxu0 0.0
  %1096 = vmatpush.msra.mxu0 0.0
  %1097 = vmatpush.msra.mxu0 0.0
  %1098 = vmatpush.msra.mxu0 0.0
  %1099 = vmatpush.msra.mxu0 0.0
  %1100 = vmatpush.msra.mxu0 0.0
  %1101 = vmatpush.msra.mxu0 0.0
  %1102 = vmatpush.msra.mxu0 0.0
  %1103 = vmatpush.msra.mxu0 0.0
  %1104 = vmatpush.msra.mxu0 0.0
  %1105 = vmatpush.msra.mxu0 0.0
  %1106 = vmatpush.msra.mxu0 0.0
  %1107 = vmatpush.msra.mxu0 0.0
  %1108 = vmatpush.msra.mxu0 0.0
  %1109 = vmatpush.msra.mxu0 0.0
  %v1110 = vand.u32 %v91, 4294901760
  %v1111 = vsub.f32 %v91, %v1110
  %v1112 = vand.u32 %v1111, 4294901760
  %1113 = vmatpush.msra.mxu0 %v1112
  %v1114 = vand.u32 %v70, 4294901760
  %1115 = vmatmul.f32.gmra.mxu0 %v1114
  %v1116 = vpop.f32.mrf.mxu0
  %v1117 = vadd.f32 %v1069, %v1116
  %v1118 = vand.u32 %v73, 4294901760
  %1119 = vmatmul.f32.gmra.mxu0 %v1118
  %v1120 = vpop.f32.mrf.mxu0
  %v1121 = vadd.f32 %v1075, %v1120
  %v1122 = vand.u32 %v76, 4294901760
  %1123 = vmatmul.f32.gmra.mxu0 %v1122
  %v1124 = vpop.f32.mrf.mxu0
  %v1125 = vadd.f32 %v1081, %v1124
  %v1126 = vand.u32 %v79, 4294901760
  %1127 = vmatmul.f32.gmra.mxu0 %v1126
  %v1128 = vpop.f32.mrf.mxu0
  %v1129 = vadd.f32 %v1087, %v1128
  %v1130 = vand.u32 %v82, 4294901760
  %1131 = vmatmul.f32.gmra.mxu0 %v1130
  %v1132 = vpop.f32.mrf.mxu0
  %v1133 = vadd.f32 %v1093, %v1132
  %1134 = vdwg.mxu0
  %1135 = vmatpush.msra.mxu0 0.0
  %1136 = vmatpush.msra.mxu0 0.0
  %1137 = vmatpush.msra.mxu0 0.0
  %1138 = vmatpush.msra.mxu0 0.0
  %1139 = vmatpush.msra.mxu0 0.0
  %1140 = vmatpush.msra.mxu0 0.0
  %1141 = vmatpush.msra.mxu0 0.0
  %1142 = vmatpush.msra.mxu0 0.0
  %1143 = vmatpush.msra.mxu0 0.0
  %1144 = vmatpush.msra.mxu0 0.0
  %1145 = vmatpush.msra.mxu0 0.0
  %1146 = vmatpush.msra.mxu0 0.0
  %1147 = vmatpush.msra.mxu0 0.0
  %1148 = vmatpush.msra.mxu0 0.0
  %1149 = vmatpush.msra.mxu0 0.0
  %v1150 = vand.u32 %v91, 4294901760
  %1151 = vmatpush.msra.mxu0 %v1150
  %v1152 = vand.u32 %v70, 4294901760
  %1153 = vmatmul.f32.gmra.mxu0 %v1152
  %v1154 = vpop.f32.mrf.mxu0
  %v1155 = vadd.f32 %v1117, %v1154
  %v1156 = vand.u32 %v73, 4294901760
  %1157 = vmatmul.f32.gmra.mxu0 %v1156
  %v1158 = vpop.f32.mrf.mxu0
  %v1159 = vadd.f32 %v1121, %v1158
  %v1160 = vand.u32 %v76, 4294901760
  %1161 = vmatmul.f32.gmra.mxu0 %v1160
  %v1162 = vpop.f32.mrf.mxu0
  %v1163 = vadd.f32 %v1125, %v1162
  %v1164 = vand.u32 %v79, 4294901760
  %1165 = vmatmul.f32.gmra.mxu0 %v1164
  %v1166 = vpop.f32.mrf.mxu0
  %v1167 = vadd.f32 %v1129, %v1166
  %v1168 = vand.u32 %v82, 4294901760
  %1169 = vmatmul.f32.gmra.mxu0 %v1168
  %v1170 = vpop.f32.mrf.mxu0
  %v1171 = vadd.f32 %v1133, %v1170
  %1172 = vdwg.mxu0
  %v1173 = vmax.f32 %v345, 0.0
  %v1174 = vmax.f32 %v615, 0.0
  %v1175 = vmax.f32 %v885, 0.0
  %v1176 = vmax.f32 %v1155, 0.0
  %v1177 = vmax.f32 %v349, 0.0
  %v1178 = vmax.f32 %v619, 0.0
  %v1179 = vmax.f32 %v889, 0.0
  %v1180 = vmax.f32 %v1159, 0.0
  %v1181 = vmax.f32 %v353, 0.0
  %v1182 = vmax.f32 %v623, 0.0
  %v1183 = vmax.f32 %v893, 0.0
  %v1184 = vmax.f32 %v1163, 0.0
  %v1185 = vmax.f32 %v357, 0.0
  %v1186 = vmax.f32 %v627, 0.0
  %v1187 = vmax.f32 %v897, 0.0
  %v1188 = vmax.f32 %v1167, 0.0
  %v1189 = vmax.f32 %v361, 0.0
  %v1190 = vmax.f32 %v631, 0.0
  %v1191 = vmax.f32 %v901, 0.0
  %v1192 = vmax.f32 %v1171, 0.0
  %1194 = vset.pattern.permute.xlu0 0
  %1195 = vperm.xlu0 %1194, %v31
  %v1196 = vpop.permute.xlu0 %1195
  %vm1198 = vcmask 326656
  %v1200 = vsel %vm1198, %v30, 0
  %1202 = vmatpush.msra.mxu0 0.0
  %1203 = vmatpush.msra.mxu0 0.0
  %1204 = vmatpush.msra.mxu0 0.0
  %1205 = vmatpush.msra.mxu0 0.0
  %1206 = vmatpush.msra.mxu0 0.0
  %1207 = vmatpush.msra.mxu0 0.0
  %1208 = vmatpush.msra.mxu0 0.0
  %1209 = vmatpush.msra.mxu0 0.0
  %1210 = vmatpush.msra.mxu0 0.0
  %1211 = vmatpush.msra.mxu0 0.0
  %1212 = vmatpush.msra.mxu0 0.0
  %v1213 = vand.u32 %v1189, 4294901760
  %1214 = vmatpush.msra.mxu0 %v1213
  %v1215 = vand.u32 %v1185, 4294901760
  %1216 = vmatpush.msra.mxu0 %v1215
  %v1217 = vand.u32 %v1181, 4294901760
  %1218 = vmatpush.msra.mxu0 %v1217
  %v1219 = vand.u32 %v1177, 4294901760
  %1220 = vmatpush.msra.mxu0 %v1219
  %v1221 = vand.u32 %v1173, 4294901760
  %1222 = vmatpush.msra.mxu0 %v1221
  %v1223 = vand.u32 %v1200, 4294901760
  %v1224 = vsub.f32 %v1200, %v1223
  %v1225 = vand.u32 %v1224, 4294901760
  %v1226 = vsub.f32 %v1224, %v1225
  %v1227 = vand.u32 %v1226, 4294901760
  %1228 = vmatmul.f32.gmra.mxu0 %v1227
  %v1229 = vpop.f32.mrf.mxu0
  %v1230 = vadd.f32 %v1196, %v1229
  %1231 = vdwg.mxu0
  %1232 = vmatpush.msra.mxu0 0.0
  %1233 = vmatpush.msra.mxu0 0.0
  %1234 = vmatpush.msra.mxu0 0.0
  %1235 = vmatpush.msra.mxu0 0.0
  %1236 = vmatpush.msra.mxu0 0.0
  %1237 = vmatpush.msra.mxu0 0.0
  %1238 = vmatpush.msra.mxu0 0.0
  %1239 = vmatpush.msra.mxu0 0.0
  %1240 = vmatpush.msra.mxu0 0.0
  %1241 = vmatpush.msra.mxu0 0.0
  %1242 = vmatpush.msra.mxu0 0.0
  %v1243 = vand.u32 %v1189, 4294901760
  %v1244 = vsub.f32 %v1189, %v1243
  %v1245 = vand.u32 %v1244, 4294901760
  %v1246 = vsub.f32 %v1244, %v1245
  %v1247 = vand.u32 %v1246, 4294901760
  %1248 = vmatpush.msra.mxu0 %v1247
  %v1249 = vand.u32 %v1185, 4294901760
  %v1250 = vsub.f32 %v1185, %v1249
  %v1251 = vand.u32 %v1250, 4294901760
  %v1252 = vsub.f32 %v1250, %v1251
  %v1253 = vand.u32 %v1252, 4294901760
  %1254 = vmatpush.msra.mxu0 %v1253
  %v1255 = vand.u32 %v1181, 4294901760
  %v1256 = vsub.f32 %v1181, %v1255
  %v1257 = vand.u32 %v1256, 4294901760
  %v1258 = vsub.f32 %v1256, %v1257
  %v1259 = vand.u32 %v1258, 4294901760
  %1260 = vmatpush.msra.mxu0 %v1259
  %v1261 = vand.u32 %v1177, 4294901760
  %v1262 = vsub.f32 %v1177, %v1261
  %v1263 = vand.u32 %v1262, 4294901760
  %v1264 = vsub.f32 %v1262, %v1263
  %v1265 = vand.u32 %v1264, 4294901760
  %1266 = vmatpush.msra.mxu0 %v1265
  %v1267 = vand.u32 %v1173, 4294901760
  %v1268 = vsub.f32 %v1173, %v1267
  %v1269 = vand.u32 %v1268, 4294901760
  %v1270 = vsub.f32 %v1268, %v1269
  %v1271 = vand.u32 %v1270, 4294901760
  %1272 = vmatpush.msra.mxu0 %v1271
  %v1273 = vand.u32 %v1200, 4294901760
  %1274 = vmatmul.f32.gmra.mxu0 %v1273
  %v1275 = vpop.f32.mrf.mxu0
  %v1276 = vadd.f32 %v1230, %v1275
  %1277 = vdwg.mxu0
  %1278 = vmatpush.msra.mxu0 0.0
  %1279 = vmatpush.msra.mxu0 0.0
  %1280 = vmatpush.msra.mxu0 0.0
  %1281 = vmatpush.msra.mxu0 0.0
  %1282 = vmatpush.msra.mxu0 0.0
  %1283 = vmatpush.msra.mxu0 0.0
  %1284 = vmatpush.msra.mxu0 0.0
  %1285 = vmatpush.msra.mxu0 0.0
  %1286 = vmatpush.msra.mxu0 0.0
  %1287 = vmatpush.msra.mxu0 0.0
  %1288 = vmatpush.msra.mxu0 0.0
  %v1289 = vand.u32 %v1189, 4294901760
  %v1290 = vsub.f32 %v1189, %v1289
  %1291 = vmatpush.msra.mxu0 %v1290
  %v1292 = vand.u32 %v1185, 4294901760
  %v1293 = vsub.f32 %v1185, %v1292
  %1294 = vmatpush.msra.mxu0 %v1293
  %v1295 = vand.u32 %v1181, 4294901760
  %v1296 = vsub.f32 %v1181, %v1295
  %1297 = vmatpush.msra.mxu0 %v1296
  %v1298 = vand.u32 %v1177, 4294901760
  %v1299 = vsub.f32 %v1177, %v1298
  %1300 = vmatpush.msra.mxu0 %v1299
  %v1301 = vand.u32 %v1173, 4294901760
  %v1302 = vsub.f32 %v1173, %v1301
  %1303 = vmatpush.msra.mxu0 %v1302
  %v1304 = vand.u32 %v1200, 4294901760
  %v1305 = vsub.f32 %v1200, %v1304
  %1306 = vmatmul.f32.gmra.mxu0 %v1305
  %v1307 = vpop.f32.mrf.mxu0
  %v1308 = vadd.f32 %v1276, %v1307
  %1309 = vdwg.mxu0
  %1310 = vmatpush.msra.mxu0 0.0
  %1311 = vmatpush.msra.mxu0 0.0
  %1312 = vmatpush.msra.mxu0 0.0
  %1313 = vmatpush.msra.mxu0 0.0
  %1314 = vmatpush.msra.mxu0 0.0
  %1315 = vmatpush.msra.mxu0 0.0
  %1316 = vmatpush.msra.mxu0 0.0
  %1317 = vmatpush.msra.mxu0 0.0
  %1318 = vmatpush.msra.mxu0 0.0
  %1319 = vmatpush.msra.mxu0 0.0
  %1320 = vmatpush.msra.mxu0 0.0
  %v1321 = vand.u32 %v1189, 4294901760
  %1322 = vmatpush.msra.mxu0 %v1321
  %v1323 = vand.u32 %v1185, 4294901760
  %1324 = vmatpush.msra.mxu0 %v1323
  %v1325 = vand.u32 %v1181, 4294901760
  %1326 = vmatpush.msra.mxu0 %v1325
  %v1327 = vand.u32 %v1177, 4294901760
  %1328 = vmatpush.msra.mxu0 %v1327
  %v1329 = vand.u32 %v1173, 4294901760
  %1330 = vmatpush.msra.mxu0 %v1329
  %v1331 = vand.u32 %v1200, 4294901760
  %v1332 = vsub.f32 %v1200, %v1331
  %v1333 = vand.u32 %v1332, 4294901760
  %1334 = vmatmul.f32.gmra.mxu0 %v1333
  %v1335 = vpop.f32.mrf.mxu0
  %v1336 = vadd.f32 %v1308, %v1335
  %1337 = vdwg.mxu0
  %1338 = vmatpush.msra.mxu0 0.0
  %1339 = vmatpush.msra.mxu0 0.0
  %1340 = vmatpush.msra.mxu0 0.0
  %1341 = vmatpush.msra.mxu0 0.0
  %1342 = vmatpush.msra.mxu0 0.0
  %1343 = vmatpush.msra.mxu0 0.0
  %1344 = vmatpush.msra.mxu0 0.0
  %1345 = vmatpush.msra.mxu0 0.0
  %1346 = vmatpush.msra.mxu0 0.0
  %1347 = vmatpush.msra.mxu0 0.0
  %1348 = vmatpush.msra.mxu0 0.0
  %v1349 = vand.u32 %v1189, 4294901760
  %v1350 = vsub.f32 %v1189, %v1349
  %v1351 = vand.u32 %v1350, 4294901760
  %1352 = vmatpush.msra.mxu0 %v1351
  %v1353 = vand.u32 %v1185, 4294901760
  %v1354 = vsub.f32 %v1185, %v1353
  %v1355 = vand.u32 %v1354, 4294901760
  %1356 = vmatpush.msra.mxu0 %v1355
  %v1357 = vand.u32 %v1181, 4294901760
  %v1358 = vsub.f32 %v1181, %v1357
  %v1359 = vand.u32 %v1358, 4294901760
  %1360 = vmatpush.msra.mxu0 %v1359
  %v1361 = vand.u32 %v1177, 4294901760
  %v1362 = vsub.f32 %v1177, %v1361
  %v1363 = vand.u32 %v1362, 4294901760
  %1364 = vmatpush.msra.mxu0 %v1363
  %v1365 = vand.u32 %v1173, 4294901760
  %v1366 = vsub.f32 %v1173, %v1365
  %v1367 = vand.u32 %v1366, 4294901760
  %1368 = vmatpush.msra.mxu0 %v1367
  %v1369 = vand.u32 %v1200, 4294901760
  %1370 = vmatmul.f32.gmra.mxu0 %v1369
  %v1371 = vpop.f32.mrf.mxu0
  %v1372 = vadd.f32 %v1336, %v1371
  %1373 = vdwg.mxu0
  %1374 = vmatpush.msra.mxu0 0.0
  %1375 = vmatpush.msra.mxu0 0.0
  %1376 = vmatpush.msra.mxu0 0.0
  %1377 = vmatpush.msra.mxu0 0.0
  %1378 = vmatpush.msra.mxu0 0.0
  %1379 = vmatpush.msra.mxu0 0.0
  %1380 = vmatpush.msra.mxu0 0.0
  %1381 = vmatpush.msra.mxu0 0.0
  %1382 = vmatpush.msra.mxu0 0.0
  %1383 = vmatpush.msra.mxu0 0.0
  %1384 = vmatpush.msra.mxu0 0.0
  %v1385 = vand.u32 %v1189, 4294901760
  %1386 = vmatpush.msra.mxu0 %v1385
  %v1387 = vand.u32 %v1185, 4294901760
  %1388 = vmatpush.msra.mxu0 %v1387
  %v1389 = vand.u32 %v1181, 4294901760
  %1390 = vmatpush.msra.mxu0 %v1389
  %v1391 = vand.u32 %v1177, 4294901760
  %1392 = vmatpush.msra.mxu0 %v1391
  %v1393 = vand.u32 %v1173, 4294901760
  %1394 = vmatpush.msra.mxu0 %v1393
  %v1395 = vand.u32 %v1200, 4294901760
  %1396 = vmatmul.f32.gmra.mxu0 %v1395
  %v1397 = vpop.f32.mrf.mxu0
  %v1398 = vadd.f32 %v1372, %v1397
  %1399 = vdwg.mxu0
  %1400 = vmatpush.msra.mxu0 0.0
  %1401 = vmatpush.msra.mxu0 0.0
  %1402 = vmatpush.msra.mxu0 0.0
  %1403 = vmatpush.msra.mxu0 0.0
  %1404 = vmatpush.msra.mxu0 0.0
  %1405 = vmatpush.msra.mxu0 0.0
  %1406 = vmatpush.msra.mxu0 0.0
  %1407 = vmatpush.msra.mxu0 0.0
  %1408 = vmatpush.msra.mxu0 0.0
  %1409 = vmatpush.msra.mxu0 0.0
  %1410 = vmatpush.msra.mxu0 0.0
  %v1411 = vand.u32 %v1190, 4294901760
  %1412 = vmatpush.msra.mxu0 %v1411
  %v1413 = vand.u32 %v1186, 4294901760
  %1414 = vmatpush.msra.mxu0 %v1413
  %v1415 = vand.u32 %v1182, 4294901760
  %1416 = vmatpush.msra.mxu0 %v1415
  %v1417 = vand.u32 %v1178, 4294901760
  %1418 = vmatpush.msra.mxu0 %v1417
  %v1419 = vand.u32 %v1174, 4294901760
  %1420 = vmatpush.msra.mxu0 %v1419
  %v1421 = vand.u32 %v1200, 4294901760
  %v1422 = vsub.f32 %v1200, %v1421
  %v1423 = vand.u32 %v1422, 4294901760
  %v1424 = vsub.f32 %v1422, %v1423
  %v1425 = vand.u32 %v1424, 4294901760
  %1426 = vmatmul.f32.gmra.mxu0 %v1425
  %v1427 = vpop.f32.mrf.mxu0
  %v1428 = vadd.f32 %v1196, %v1427
  %1429 = vdwg.mxu0
  %1430 = vmatpush.msra.mxu0 0.0
  %1431 = vmatpush.msra.mxu0 0.0
  %1432 = vmatpush.msra.mxu0 0.0
  %1433 = vmatpush.msra.mxu0 0.0
  %1434 = vmatpush.msra.mxu0 0.0
  %1435 = vmatpush.msra.mxu0 0.0
  %1436 = vmatpush.msra.mxu0 0.0
  %1437 = vmatpush.msra.mxu0 0.0
  %1438 = vmatpush.msra.mxu0 0.0
  %1439 = vmatpush.msra.mxu0 0.0
  %1440 = vmatpush.msra.mxu0 0.0
  %v1441 = vand.u32 %v1190, 4294901760
  %v1442 = vsub.f32 %v1190, %v1441
  %v1443 = vand.u32 %v1442, 4294901760
  %v1444 = vsub.f32 %v1442, %v1443
  %v1445 = vand.u32 %v1444, 4294901760
  %1446 = vmatpush.msra.mxu0 %v1445
  %v1447 = vand.u32 %v1186, 4294901760
  %v1448 = vsub.f32 %v1186, %v1447
  %v1449 = vand.u32 %v1448, 4294901760
  %v1450 = vsub.f32 %v1448, %v1449
  %v1451 = vand.u32 %v1450, 4294901760
  %1452 = vmatpush.msra.mxu0 %v1451
  %v1453 = vand.u32 %v1182, 4294901760
  %v1454 = vsub.f32 %v1182, %v1453
  %v1455 = vand.u32 %v1454, 4294901760
  %v1456 = vsub.f32 %v1454, %v1455
  %v1457 = vand.u32 %v1456, 4294901760
  %1458 = vmatpush.msra.mxu0 %v1457
  %v1459 = vand.u32 %v1178, 4294901760
  %v1460 = vsub.f32 %v1178, %v1459
  %v1461 = vand.u32 %v1460, 4294901760
  %v1462 = vsub.f32 %v1460, %v1461
  %v1463 = vand.u32 %v1462, 4294901760
  %1464 = vmatpush.msra.mxu0 %v1463
  %v1465 = vand.u32 %v1174, 4294901760
  %v1466 = vsub.f32 %v1174, %v1465
  %v1467 = vand.u32 %v1466, 4294901760
  %v1468 = vsub.f32 %v1466, %v1467
  %v1469 = vand.u32 %v1468, 4294901760
  %1470 = vmatpush.msra.mxu0 %v1469
  %v1471 = vand.u32 %v1200, 4294901760
  %1472 = vmatmul.f32.gmra.mxu0 %v1471
  %v1473 = vpop.f32.mrf.mxu0
  %v1474 = vadd.f32 %v1428, %v1473
  %1475 = vdwg.mxu0
  %1476 = vmatpush.msra.mxu0 0.0
  %1477 = vmatpush.msra.mxu0 0.0
  %1478 = vmatpush.msra.mxu0 0.0
  %1479 = vmatpush.msra.mxu0 0.0
  %1480 = vmatpush.msra.mxu0 0.0
  %1481 = vmatpush.msra.mxu0 0.0
  %1482 = vmatpush.msra.mxu0 0.0
  %1483 = vmatpush.msra.mxu0 0.0
  %1484 = vmatpush.msra.mxu0 0.0
  %1485 = vmatpush.msra.mxu0 0.0
  %1486 = vmatpush.msra.mxu0 0.0
  %v1487 = vand.u32 %v1190, 4294901760
  %v1488 = vsub.f32 %v1190, %v1487
  %1489 = vmatpush.msra.mxu0 %v1488
  %v1490 = vand.u32 %v1186, 4294901760
  %v1491 = vsub.f32 %v1186, %v1490
  %1492 = vmatpush.msra.mxu0 %v1491
  %v1493 = vand.u32 %v1182, 4294901760
  %v1494 = vsub.f32 %v1182, %v1493
  %1495 = vmatpush.msra.mxu0 %v1494
  %v1496 = vand.u32 %v1178, 4294901760
  %v1497 = vsub.f32 %v1178, %v1496
  %1498 = vmatpush.msra.mxu0 %v1497
  %v1499 = vand.u32 %v1174, 4294901760
  %v1500 = vsub.f32 %v1174, %v1499
  %1501 = vmatpush.msra.mxu0 %v1500
  %v1502 = vand.u32 %v1200, 4294901760
  %v1503 = vsub.f32 %v1200, %v1502
  %1504 = vmatmul.f32.gmra.mxu0 %v1503
  %v1505 = vpop.f32.mrf.mxu0
  %v1506 = vadd.f32 %v1474, %v1505
  %1507 = vdwg.mxu0
  %1508 = vmatpush.msra.mxu0 0.0
  %1509 = vmatpush.msra.mxu0 0.0
  %1510 = vmatpush.msra.mxu0 0.0
  %1511 = vmatpush.msra.mxu0 0.0
  %1512 = vmatpush.msra.mxu0 0.0
  %1513 = vmatpush.msra.mxu0 0.0
  %1514 = vmatpush.msra.mxu0 0.0
  %1515 = vmatpush.msra.mxu0 0.0
  %1516 = vmatpush.msra.mxu0 0.0
  %1517 = vmatpush.msra.mxu0 0.0
  %1518 = vmatpush.msra.mxu0 0.0
  %v1519 = vand.u32 %v1190, 4294901760
  %1520 = vmatpush.msra.mxu0 %v1519
  %v1521 = vand.u32 %v1186, 4294901760
  %1522 = vmatpush.msra.mxu0 %v1521
  %v1523 = vand.u32 %v1182, 4294901760
  %1524 = vmatpush.msra.mxu0 %v1523
  %v1525 = vand.u32 %v1178, 4294901760
  %1526 = vmatpush.msra.mxu0 %v1525
  %v1527 = vand.u32 %v1174, 4294901760
  %1528 = vmatpush.msra.mxu0 %v1527
  %v1529 = vand.u32 %v1200, 4294901760
  %v1530 = vsub.f32 %v1200, %v1529
  %v1531 = vand.u32 %v1530, 4294901760
  %1532 = vmatmul.f32.gmra.mxu0 %v1531
  %v1533 = vpop.f32.mrf.mxu0
  %v1534 = vadd.f32 %v1506, %v1533
  %1535 = vdwg.mxu0
  %1536 = vmatpush.msra.mxu0 0.0
  %1537 = vmatpush.msra.mxu0 0.0
  %1538 = vmatpush.msra.mxu0 0.0
  %1539 = vmatpush.msra.mxu0 0.0
  %1540 = vmatpush.msra.mxu0 0.0
  %1541 = vmatpush.msra.mxu0 0.0
  %1542 = vmatpush.msra.mxu0 0.0
  %1543 = vmatpush.msra.mxu0 0.0
  %1544 = vmatpush.msra.mxu0 0.0
  %1545 = vmatpush.msra.mxu0 0.0
  %1546 = vmatpush.msra.mxu0 0.0
  %v1547 = vand.u32 %v1190, 4294901760
  %v1548 = vsub.f32 %v1190, %v1547
  %v1549 = vand.u32 %v1548, 4294901760
  %1550 = vmatpush.msra.mxu0 %v1549
  %v1551 = vand.u32 %v1186, 4294901760
  %v1552 = vsub.f32 %v1186, %v1551
  %v1553 = vand.u32 %v1552, 4294901760
  %1554 = vmatpush.msra.mxu0 %v1553
  %v1555 = vand.u32 %v1182, 4294901760
  %v1556 = vsub.f32 %v1182, %v1555
  %v1557 = vand.u32 %v1556, 4294901760
  %1558 = vmatpush.msra.mxu0 %v1557
  %v1559 = vand.u32 %v1178, 4294901760
  %v1560 = vsub.f32 %v1178, %v1559
  %v1561 = vand.u32 %v1560, 4294901760
  %1562 = vmatpush.msra.mxu0 %v1561
  %v1563 = vand.u32 %v1174, 4294901760
  %v1564 = vsub.f32 %v1174, %v1563
  %v1565 = vand.u32 %v1564, 4294901760
  %1566 = vmatpush.msra.mxu0 %v1565
  %v1567 = vand.u32 %v1200, 4294901760
  %1568 = vmatmul.f32.gmra.mxu0 %v1567
  %v1569 = vpop.f32.mrf.mxu0
  %v1570 = vadd.f32 %v1534, %v1569
  %1571 = vdwg.mxu0
  %1572 = vmatpush.msra.mxu0 0.0
  %1573 = vmatpush.msra.mxu0 0.0
  %1574 = vmatpush.msra.mxu0 0.0
  %1575 = vmatpush.msra.mxu0 0.0
  %1576 = vmatpush.msra.mxu0 0.0
  %1577 = vmatpush.msra.mxu0 0.0
  %1578 = vmatpush.msra.mxu0 0.0
  %1579 = vmatpush.msra.mxu0 0.0
  %1580 = vmatpush.msra.mxu0 0.0
  %1581 = vmatpush.msra.mxu0 0.0
  %1582 = vmatpush.msra.mxu0 0.0
  %v1583 = vand.u32 %v1190, 4294901760
  %1584 = vmatpush.msra.mxu0 %v1583
  %v1585 = vand.u32 %v1186, 4294901760
  %1586 = vmatpush.msra.mxu0 %v1585
  %v1587 = vand.u32 %v1182, 4294901760
  %1588 = vmatpush.msra.mxu0 %v1587
  %v1589 = vand.u32 %v1178, 4294901760
  %1590 = vmatpush.msra.mxu0 %v1589
  %v1591 = vand.u32 %v1174, 4294901760
  %1592 = vmatpush.msra.mxu0 %v1591
  %v1593 = vand.u32 %v1200, 4294901760
  %1594 = vmatmul.f32.gmra.mxu0 %v1593
  %v1595 = vpop.f32.mrf.mxu0
  %v1596 = vadd.f32 %v1570, %v1595
  %1597 = vdwg.mxu0
  %1598 = vmatpush.msra.mxu0 0.0
  %1599 = vmatpush.msra.mxu0 0.0
  %1600 = vmatpush.msra.mxu0 0.0
  %1601 = vmatpush.msra.mxu0 0.0
  %1602 = vmatpush.msra.mxu0 0.0
  %1603 = vmatpush.msra.mxu0 0.0
  %1604 = vmatpush.msra.mxu0 0.0
  %1605 = vmatpush.msra.mxu0 0.0
  %1606 = vmatpush.msra.mxu0 0.0
  %1607 = vmatpush.msra.mxu0 0.0
  %1608 = vmatpush.msra.mxu0 0.0
  %v1609 = vand.u32 %v1191, 4294901760
  %1610 = vmatpush.msra.mxu0 %v1609
  %v1611 = vand.u32 %v1187, 4294901760
  %1612 = vmatpush.msra.mxu0 %v1611
  %v1613 = vand.u32 %v1183, 4294901760
  %1614 = vmatpush.msra.mxu0 %v1613
  %v1615 = vand.u32 %v1179, 4294901760
  %1616 = vmatpush.msra.mxu0 %v1615
  %v1617 = vand.u32 %v1175, 4294901760
  %1618 = vmatpush.msra.mxu0 %v1617
  %v1619 = vand.u32 %v1200, 4294901760
  %v1620 = vsub.f32 %v1200, %v1619
  %v1621 = vand.u32 %v1620, 4294901760
  %v1622 = vsub.f32 %v1620, %v1621
  %v1623 = vand.u32 %v1622, 4294901760
  %1624 = vmatmul.f32.gmra.mxu0 %v1623
  %v1625 = vpop.f32.mrf.mxu0
  %v1626 = vadd.f32 %v1196, %v1625
  %1627 = vdwg.mxu0
  %1628 = vmatpush.msra.mxu0 0.0
  %1629 = vmatpush.msra.mxu0 0.0
  %1630 = vmatpush.msra.mxu0 0.0
  %1631 = vmatpush.msra.mxu0 0.0
  %1632 = vmatpush.msra.mxu0 0.0
  %1633 = vmatpush.msra.mxu0 0.0
  %1634 = vmatpush.msra.mxu0 0.0
  %1635 = vmatpush.msra.mxu0 0.0
  %1636 = vmatpush.msra.mxu0 0.0
  %1637 = vmatpush.msra.mxu0 0.0
  %1638 = vmatpush.msra.mxu0 0.0
  %v1639 = vand.u32 %v1191, 4294901760
  %v1640 = vsub.f32 %v1191, %v1639
  %v1641 = vand.u32 %v1640, 4294901760
  %v1642 = vsub.f32 %v1640, %v1641
  %v1643 = vand.u32 %v1642, 4294901760
  %1644 = vmatpush.msra.mxu0 %v1643
  %v1645 = vand.u32 %v1187, 4294901760
  %v1646 = vsub.f32 %v1187, %v1645
  %v1647 = vand.u32 %v1646, 4294901760
  %v1648 = vsub.f32 %v1646, %v1647
  %v1649 = vand.u32 %v1648, 4294901760
  %1650 = vmatpush.msra.mxu0 %v1649
  %v1651 = vand.u32 %v1183, 4294901760
  %v1652 = vsub.f32 %v1183, %v1651
  %v1653 = vand.u32 %v1652, 4294901760
  %v1654 = vsub.f32 %v1652, %v1653
  %v1655 = vand.u32 %v1654, 4294901760
  %1656 = vmatpush.msra.mxu0 %v1655
  %v1657 = vand.u32 %v1179, 4294901760
  %v1658 = vsub.f32 %v1179, %v1657
  %v1659 = vand.u32 %v1658, 4294901760
  %v1660 = vsub.f32 %v1658, %v1659
  %v1661 = vand.u32 %v1660, 4294901760
  %1662 = vmatpush.msra.mxu0 %v1661
  %v1663 = vand.u32 %v1175, 4294901760
  %v1664 = vsub.f32 %v1175, %v1663
  %v1665 = vand.u32 %v1664, 4294901760
  %v1666 = vsub.f32 %v1664, %v1665
  %v1667 = vand.u32 %v1666, 4294901760
  %1668 = vmatpush.msra.mxu0 %v1667
  %v1669 = vand.u32 %v1200, 4294901760
  %1670 = vmatmul.f32.gmra.mxu0 %v1669
  %v1671 = vpop.f32.mrf.mxu0
  %v1672 = vadd.f32 %v1626, %v1671
  %1673 = vdwg.mxu0
  %1674 = vmatpush.msra.mxu0 0.0
  %1675 = vmatpush.msra.mxu0 0.0
  %1676 = vmatpush.msra.mxu0 0.0
  %1677 = vmatpush.msra.mxu0 0.0
  %1678 = vmatpush.msra.mxu0 0.0
  %1679 = vmatpush.msra.mxu0 0.0
  %1680 = vmatpush.msra.mxu0 0.0
  %1681 = vmatpush.msra.mxu0 0.0
  %1682 = vmatpush.msra.mxu0 0.0
  %1683 = vmatpush.msra.mxu0 0.0
  %1684 = vmatpush.msra.mxu0 0.0
  %v1685 = vand.u32 %v1191, 4294901760
  %v1686 = vsub.f32 %v1191, %v1685
  %1687 = vmatpush.msra.mxu0 %v1686
  %v1688 = vand.u32 %v1187, 4294901760
  %v1689 = vsub.f32 %v1187, %v1688
  %1690 = vmatpush.msra.mxu0 %v1689
  %v1691 = vand.u32 %v1183, 4294901760
  %v1692 = vsub.f32 %v1183, %v1691
  %1693 = vmatpush.msra.mxu0 %v1692
  %v1694 = vand.u32 %v1179, 4294901760
  %v1695 = vsub.f32 %v1179, %v1694
  %1696 = vmatpush.msra.mxu0 %v1695
  %v1697 = vand.u32 %v1175, 4294901760
  %v1698 = vsub.f32 %v1175, %v1697
  %1699 = vmatpush.msra.mxu0 %v1698
  %v1700 = vand.u32 %v1200, 4294901760
  %v1701 = vsub.f32 %v1200, %v1700
  %1702 = vmatmul.f32.gmra.mxu0 %v1701
  %v1703 = vpop.f32.mrf.mxu0
  %v1704 = vadd.f32 %v1672, %v1703
  %1705 = vdwg.mxu0
  %1706 = vmatpush.msra.mxu0 0.0
  %1707 = vmatpush.msra.mxu0 0.0
  %1708 = vmatpush.msra.mxu0 0.0
  %1709 = vmatpush.msra.mxu0 0.0
  %1710 = vmatpush.msra.mxu0 0.0
  %1711 = vmatpush.msra.mxu0 0.0
  %1712 = vmatpush.msra.mxu0 0.0
  %1713 = vmatpush.msra.mxu0 0.0
  %1714 = vmatpush.msra.mxu0 0.0
  %1715 = vmatpush.msra.mxu0 0.0
  %1716 = vmatpush.msra.mxu0 0.0
  %v1717 = vand.u32 %v1191, 4294901760
  %1718 = vmatpush.msra.mxu0 %v1717
  %v1719 = vand.u32 %v1187, 4294901760
  %1720 = vmatpush.msra.mxu0 %v1719
  %v1721 = vand.u32 %v1183, 4294901760
  %1722 = vmatpush.msra.mxu0 %v1721
  %v1723 = vand.u32 %v1179, 4294901760
  %1724 = vmatpush.msra.mxu0 %v1723
  %v1725 = vand.u32 %v1175, 4294901760
  %1726 = vmatpush.msra.mxu0 %v1725
  %v1727 = vand.u32 %v1200, 4294901760
  %v1728 = vsub.f32 %v1200, %v1727
  %v1729 = vand.u32 %v1728, 4294901760
  %1730 = vmatmul.f32.gmra.mxu0 %v1729
  %v1731 = vpop.f32.mrf.mxu0
  %v1732 = vadd.f32 %v1704, %v1731
  %1733 = vdwg.mxu0
  %1734 = vmatpush.msra.mxu0 0.0
  %1735 = vmatpush.msra.mxu0 0.0
  %1736 = vmatpush.msra.mxu0 0.0
  %1737 = vmatpush.msra.mxu0 0.0
  %1738 = vmatpush.msra.mxu0 0.0
  %1739 = vmatpush.msra.mxu0 0.0
  %1740 = vmatpush.msra.mxu0 0.0
  %1741 = vmatpush.msra.mxu0 0.0
  %1742 = vmatpush.msra.mxu0 0.0
  %1743 = vmatpush.msra.mxu0 0.0
  %1744 = vmatpush.msra.mxu0 0.0
  %v1745 = vand.u32 %v1191, 4294901760
  %v1746 = vsub.f32 %v1191, %v1745
  %v1747 = vand.u32 %v1746, 4294901760
  %1748 = vmatpush.msra.mxu0 %v1747
  %v1749 = vand.u32 %v1187, 4294901760
  %v1750 = vsub.f32 %v1187, %v1749
  %v1751 = vand.u32 %v1750, 4294901760
  %1752 = vmatpush.msra.mxu0 %v1751
  %v1753 = vand.u32 %v1183, 4294901760
  %v1754 = vsub.f32 %v1183, %v1753
  %v1755 = vand.u32 %v1754, 4294901760
  %1756 = vmatpush.msra.mxu0 %v1755
  %v1757 = vand.u32 %v1179, 4294901760
  %v1758 = vsub.f32 %v1179, %v1757
  %v1759 = vand.u32 %v1758, 4294901760
  %1760 = vmatpush.msra.mxu0 %v1759
  %v1761 = vand.u32 %v1175, 4294901760
  %v1762 = vsub.f32 %v1175, %v1761
  %v1763 = vand.u32 %v1762, 4294901760
  %1764 = vmatpush.msra.mxu0 %v1763
  %v1765 = vand.u32 %v1200, 4294901760
  %1766 = vmatmul.f32.gmra.mxu0 %v1765
  %v1767 = vpop.f32.mrf.mxu0
  %v1768 = vadd.f32 %v1732, %v1767
  %1769 = vdwg.mxu0
  %1770 = vmatpush.msra.mxu0 0.0
  %1771 = vmatpush.msra.mxu0 0.0
  %1772 = vmatpush.msra.mxu0 0.0
  %1773 = vmatpush.msra.mxu0 0.0
  %1774 = vmatpush.msra.mxu0 0.0
  %1775 = vmatpush.msra.mxu0 0.0
  %1776 = vmatpush.msra.mxu0 0.0
  %1777 = vmatpush.msra.mxu0 0.0
  %1778 = vmatpush.msra.mxu0 0.0
  %1779 = vmatpush.msra.mxu0 0.0
  %1780 = vmatpush.msra.mxu0 0.0
  %v1781 = vand.u32 %v1191, 4294901760
  %1782 = vmatpush.msra.mxu0 %v1781
  %v1783 = vand.u32 %v1187, 4294901760
  %1784 = vmatpush.msra.mxu0 %v1783
  %v1785 = vand.u32 %v1183, 4294901760
  %1786 = vmatpush.msra.mxu0 %v1785
  %v1787 = vand.u32 %v1179, 4294901760
  %1788 = vmatpush.msra.mxu0 %v1787
  %v1789 = vand.u32 %v1175, 4294901760
  %1790 = vmatpush.msra.mxu0 %v1789
  %v1791 = vand.u32 %v1200, 4294901760
  %1792 = vmatmul.f32.gmra.mxu0 %v1791
  %v1793 = vpop.f32.mrf.mxu0
  %v1794 = vadd.f32 %v1768, %v1793
  %1795 = vdwg.mxu0
  %1796 = vmatpush.msra.mxu0 0.0
  %1797 = vmatpush.msra.mxu0 0.0
  %1798 = vmatpush.msra.mxu0 0.0
  %1799 = vmatpush.msra.mxu0 0.0
  %1800 = vmatpush.msra.mxu0 0.0
  %1801 = vmatpush.msra.mxu0 0.0
  %1802 = vmatpush.msra.mxu0 0.0
  %1803 = vmatpush.msra.mxu0 0.0
  %1804 = vmatpush.msra.mxu0 0.0
  %1805 = vmatpush.msra.mxu0 0.0
  %1806 = vmatpush.msra.mxu0 0.0
  %v1807 = vand.u32 %v1192, 4294901760
  %1808 = vmatpush.msra.mxu0 %v1807
  %v1809 = vand.u32 %v1188, 4294901760
  %1810 = vmatpush.msra.mxu0 %v1809
  %v1811 = vand.u32 %v1184, 4294901760
  %1812 = vmatpush.msra.mxu0 %v1811
  %v1813 = vand.u32 %v1180, 4294901760
  %1814 = vmatpush.msra.mxu0 %v1813
  %v1815 = vand.u32 %v1176, 4294901760
  %1816 = vmatpush.msra.mxu0 %v1815
  %v1817 = vand.u32 %v1200, 4294901760
  %v1818 = vsub.f32 %v1200, %v1817
  %v1819 = vand.u32 %v1818, 4294901760
  %v1820 = vsub.f32 %v1818, %v1819
  %v1821 = vand.u32 %v1820, 4294901760
  %1822 = vmatmul.f32.gmra.mxu0 %v1821
  %v1823 = vpop.f32.mrf.mxu0
  %v1824 = vadd.f32 %v1196, %v1823
  %1825 = vdwg.mxu0
  %1826 = vmatpush.msra.mxu0 0.0
  %1827 = vmatpush.msra.mxu0 0.0
  %1828 = vmatpush.msra.mxu0 0.0
  %1829 = vmatpush.msra.mxu0 0.0
  %1830 = vmatpush.msra.mxu0 0.0
  %1831 = vmatpush.msra.mxu0 0.0
  %1832 = vmatpush.msra.mxu0 0.0
  %1833 = vmatpush.msra.mxu0 0.0
  %1834 = vmatpush.msra.mxu0 0.0
  %1835 = vmatpush.msra.mxu0 0.0
  %1836 = vmatpush.msra.mxu0 0.0
  %v1837 = vand.u32 %v1192, 4294901760
  %v1838 = vsub.f32 %v1192, %v1837
  %v1839 = vand.u32 %v1838, 4294901760
  %v1840 = vsub.f32 %v1838, %v1839
  %v1841 = vand.u32 %v1840, 4294901760
  %1842 = vmatpush.msra.mxu0 %v1841
  %v1843 = vand.u32 %v1188, 4294901760
  %v1844 = vsub.f32 %v1188, %v1843
  %v1845 = vand.u32 %v1844, 4294901760
  %v1846 = vsub.f32 %v1844, %v1845
  %v1847 = vand.u32 %v1846, 4294901760
  %1848 = vmatpush.msra.mxu0 %v1847
  %v1849 = vand.u32 %v1184, 4294901760
  %v1850 = vsub.f32 %v1184, %v1849
  %v1851 = vand.u32 %v1850, 4294901760
  %v1852 = vsub.f32 %v1850, %v1851
  %v1853 = vand.u32 %v1852, 4294901760
  %1854 = vmatpush.msra.mxu0 %v1853
  %v1855 = vand.u32 %v1180, 4294901760
  %v1856 = vsub.f32 %v1180, %v1855
  %v1857 = vand.u32 %v1856, 4294901760
  %v1858 = vsub.f32 %v1856, %v1857
  %v1859 = vand.u32 %v1858, 4294901760
  %1860 = vmatpush.msra.mxu0 %v1859
  %v1861 = vand.u32 %v1176, 4294901760
  %v1862 = vsub.f32 %v1176, %v1861
  %v1863 = vand.u32 %v1862, 4294901760
  %v1864 = vsub.f32 %v1862, %v1863
  %v1865 = vand.u32 %v1864, 4294901760
  %1866 = vmatpush.msra.mxu0 %v1865
  %v1867 = vand.u32 %v1200, 4294901760
  %1868 = vmatmul.f32.gmra.mxu0 %v1867
  %v1869 = vpop.f32.mrf.mxu0
  %v1870 = vadd.f32 %v1824, %v1869
  %1871 = vdwg.mxu0
  %1872 = vmatpush.msra.mxu0 0.0
  %1873 = vmatpush.msra.mxu0 0.0
  %1874 = vmatpush.msra.mxu0 0.0
  %1875 = vmatpush.msra.mxu0 0.0
  %1876 = vmatpush.msra.mxu0 0.0
  %1877 = vmatpush.msra.mxu0 0.0
  %1878 = vmatpush.msra.mxu0 0.0
  %1879 = vmatpush.msra.mxu0 0.0
  %1880 = vmatpush.msra.mxu0 0.0
  %1881 = vmatpush.msra.mxu0 0.0
  %1882 = vmatpush.msra.mxu0 0.0
  %v1883 = vand.u32 %v1192, 4294901760
  %v1884 = vsub.f32 %v1192, %v1883
  %1885 = vmatpush.msra.mxu0 %v1884
  %v1886 = vand.u32 %v1188, 4294901760
  %v1887 = vsub.f32 %v1188, %v1886
  %1888 = vmatpush.msra.mxu0 %v1887
  %v1889 = vand.u32 %v1184, 4294901760
  %v1890 = vsub.f32 %v1184, %v1889
  %1891 = vmatpush.msra.mxu0 %v1890
  %v1892 = vand.u32 %v1180, 4294901760
  %v1893 = vsub.f32 %v1180, %v1892
  %1894 = vmatpush.msra.mxu0 %v1893
  %v1895 = vand.u32 %v1176, 4294901760
  %v1896 = vsub.f32 %v1176, %v1895
  %1897 = vmatpush.msra.mxu0 %v1896
  %v1898 = vand.u32 %v1200, 4294901760
  %v1899 = vsub.f32 %v1200, %v1898
  %1900 = vmatmul.f32.gmra.mxu0 %v1899
  %v1901 = vpop.f32.mrf.mxu0
  %v1902 = vadd.f32 %v1870, %v1901
  %1903 = vdwg.mxu0
  %1904 = vmatpush.msra.mxu0 0.0
  %1905 = vmatpush.msra.mxu0 0.0
  %1906 = vmatpush.msra.mxu0 0.0
  %1907 = vmatpush.msra.mxu0 0.0
  %1908 = vmatpush.msra.mxu0 0.0
  %1909 = vmatpush.msra.mxu0 0.0
  %1910 = vmatpush.msra.mxu0 0.0
  %1911 = vmatpush.msra.mxu0 0.0
  %1912 = vmatpush.msra.mxu0 0.0
  %1913 = vmatpush.msra.mxu0 0.0
  %1914 = vmatpush.msra.mxu0 0.0
  %v1915 = vand.u32 %v1192, 4294901760
  %1916 = vmatpush.msra.mxu0 %v1915
  %v1917 = vand.u32 %v1188, 4294901760
  %1918 = vmatpush.msra.mxu0 %v1917
  %v1919 = vand.u32 %v1184, 4294901760
  %1920 = vmatpush.msra.mxu0 %v1919
  %v1921 = vand.u32 %v1180, 4294901760
  %1922 = vmatpush.msra.mxu0 %v1921
  %v1923 = vand.u32 %v1176, 4294901760
  %1924 = vmatpush.msra.mxu0 %v1923
  %v1925 = vand.u32 %v1200, 4294901760
  %v1926 = vsub.f32 %v1200, %v1925
  %v1927 = vand.u32 %v1926, 4294901760
  %1928 = vmatmul.f32.gmra.mxu0 %v1927
  %v1929 = vpop.f32.mrf.mxu0
  %v1930 = vadd.f32 %v1902, %v1929
  %1931 = vdwg.mxu0
  %1932 = vmatpush.msra.mxu0 0.0
  %1933 = vmatpush.msra.mxu0 0.0
  %1934 = vmatpush.msra.mxu0 0.0
  %1935 = vmatpush.msra.mxu0 0.0
  %1936 = vmatpush.msra.mxu0 0.0
  %1937 = vmatpush.msra.mxu0 0.0
  %1938 = vmatpush.msra.mxu0 0.0
  %1939 = vmatpush.msra.mxu0 0.0
  %1940 = vmatpush.msra.mxu0 0.0
  %1941 = vmatpush.msra.mxu0 0.0
  %1942 = vmatpush.msra.mxu0 0.0
  %v1943 = vand.u32 %v1192, 4294901760
  %v1944 = vsub.f32 %v1192, %v1943
  %v1945 = vand.u32 %v1944, 4294901760
  %1946 = vmatpush.msra.mxu0 %v1945
  %v1947 = vand.u32 %v1188, 4294901760
  %v1948 = vsub.f32 %v1188, %v1947
  %v1949 = vand.u32 %v1948, 4294901760
  %1950 = vmatpush.msra.mxu0 %v1949
  %v1951 = vand.u32 %v1184, 4294901760
  %v1952 = vsub.f32 %v1184, %v1951
  %v1953 = vand.u32 %v1952, 4294901760
  %1954 = vmatpush.msra.mxu0 %v1953
  %v1955 = vand.u32 %v1180, 4294901760
  %v1956 = vsub.f32 %v1180, %v1955
  %v1957 = vand.u32 %v1956, 4294901760
  %1958 = vmatpush.msra.mxu0 %v1957
  %v1959 = vand.u32 %v1176, 4294901760
  %v1960 = vsub.f32 %v1176, %v1959
  %v1961 = vand.u32 %v1960, 4294901760
  %1962 = vmatpush.msra.mxu0 %v1961
  %v1963 = vand.u32 %v1200, 4294901760
  %1964 = vmatmul.f32.gmra.mxu0 %v1963
  %v1965 = vpop.f32.mrf.mxu0
  %v1966 = vadd.f32 %v1930, %v1965
  %1967 = vdwg.mxu0
  %1968 = vmatpush.msra.mxu0 0.0
  %1969 = vmatpush.msra.mxu0 0.0
  %1970 = vmatpush.msra.mxu0 0.0
  %1971 = vmatpush.msra.mxu0 0.0
  %1972 = vmatpush.msra.mxu0 0.0
  %1973 = vmatpush.msra.mxu0 0.0
  %1974 = vmatpush.msra.mxu0 0.0
  %1975 = vmatpush.msra.mxu0 0.0
  %1976 = vmatpush.msra.mxu0 0.0
  %1977 = vmatpush.msra.mxu0 0.0
  %1978 = vmatpush.msra.mxu0 0.0
  %v1979 = vand.u32 %v1192, 4294901760
  %1980 = vmatpush.msra.mxu0 %v1979
  %v1981 = vand.u32 %v1188, 4294901760
  %1982 = vmatpush.msra.mxu0 %v1981
  %v1983 = vand.u32 %v1184, 4294901760
  %1984 = vmatpush.msra.mxu0 %v1983
  %v1985 = vand.u32 %v1180, 4294901760
  %1986 = vmatpush.msra.mxu0 %v1985
  %v1987 = vand.u32 %v1176, 4294901760
  %1988 = vmatpush.msra.mxu0 %v1987
  %v1989 = vand.u32 %v1200, 4294901760
  %1990 = vmatmul.f32.gmra.mxu0 %v1989
  %v1991 = vpop.f32.mrf.mxu0
  %v1992 = vadd.f32 %v1966, %v1991
  %1993 = vdwg.mxu0
  %v1998 = vrot.slane %v1596, 4
  %v1999 = vrot.slane %v1992, 4
  %v2000 = vsel %vm84, %v1398, %v1998
  %v2001 = vsel %vm84, %v1794, %v1999
  %2004 = vst [vmem:[%s5] sm:$0x77] %v2000
  %2005 = vst [vmem:[%s5 + $0x8] sm:$0x77] %v2001
  // Predicated region
  $region22: #{net2_forward.1} parent=0 // pred_check
    _
  $region23: #{net2_forward.1} parent=0 // pred_check_branch
    %2007 = sbr.rel (0) target = $region25
  $region24: #{net2_forward.1} parent=0 // pred_region
    _
  $region25: #{net2_forward.1} parent=0 // pred_fallthru
    _
  // Predicated region
  $region26: #{net2_forward.1} parent=0 // pred_check
    _
  $region27: #{net2_forward.1} parent=0 // pred_check_branch
    %2009 = sbr.rel (0) target = $region29
  $region28: #{net2_forward.1} parent=0 // pred_region
    _
  $region29: #{net2_forward.1} parent=0 // pred_fallthru
    _

</llo_original>
